<compile_context>
chip_gen: v5e
topology: v5e:2x2
jax: 0.10.0
libtpu: 0.0.40
codegen_flags: <defaults>
</compile_context>

<pallas_src>
import functools
import math

import jax
import jax.numpy as jnp
from jax.experimental import pallas as pl
from jax.experimental.pallas import tpu as pltpu

EPS = 1e-6
_NEG_BIG = -1e30  # bias value for padded output lanes -> exp() underflows to 0


def _normalize(x):
    """Annotated-transformer LN core: (x - mean) / (std + eps), unbiased std.

    gamma/beta are folded into the following Linear in the wrapper.  The
    reciprocal of (std + eps) is exact (one divide per row, negligible).
    """
    mean = jnp.mean(x, axis=-1, keepdims=True)
    var = jnp.sum((x - mean) ** 2, axis=-1, keepdims=True) * (1.0 / (x.shape[-1] - 1))
    std = jnp.sqrt(var)
    return (x - mean) * (1.0 / (std + EPS))


def _elu(x):
    # torch.nn.ELU(alpha=1): x if x > 0 else exp(x) - 1.
    return jnp.where(x > 0, x, jnp.exp(x) - 1.0)


def base_moe_kernel(x_ref,
                    w0, b0, w1, b1, w2, b2, w_out, b_out,
                    o_ref,
                    *, num_endpoints, seq_len, batches_per_block):
    # x_ref block: (batches_per_block * E * S, Din), rows ordered (batch, endpoint, seq).
    x = x_ref[...].astype(jnp.float32)

    # input LN (affine folded into w0/b0) + hidden stack
    x = _normalize(x)
    x = jnp.dot(x, w0[...], preferred_element_type=jnp.float32) + b0[...]
    x = _normalize(_elu(x))
    x = jnp.dot(x, w1[...], preferred_element_type=jnp.float32) + b1[...]
    x = _normalize(_elu(x))
    x = jnp.dot(x, w2[...], preferred_element_type=jnp.float32) + b2[...]
    x = _normalize(_elu(x))

    # mean over endpoints, per batch: static (seq_len)-row slices are free views
    # as long as seq_len is a multiple of 8 (f32 sublane).
    parts = []
    for bb in range(batches_per_block):
        base = bb * num_endpoints * seq_len
        acc = x[base:base + seq_len, :]
        for e in range(1, num_endpoints):
            acc = acc + x[base + e * seq_len:base + (e + 1) * seq_len, :]
        parts.append(acc)
    h = parts[0] if batches_per_block == 1 else jnp.concatenate(parts, axis=0)
    h = h * (1.0 / num_endpoints)                                   # (bp*S, H_last)

    # output feedforward (last LN affine folded in; columns padded to a lane
    # multiple, padded bias lanes are -1e30 so they vanish under softmax)
    logits = jnp.dot(h, w_out[...], preferred_element_type=jnp.float32) + b_out[...]
    m = jnp.max(logits, axis=-1, keepdims=True)
    p = jnp.exp(logits - m)
    denom = jnp.sum(p, axis=-1, keepdims=True)
    probs = p * (1.0 / denom)            # exact normalization: rows sum to 1

    o_ref[...] = probs.astype(o_ref.dtype)


def _fold_ln_into_linear(gamma, beta, w, b):
    """LayerNorm(x) @ W + b  ==  normalize(x) @ (diag(gamma) @ W) + (beta @ W + b)."""
    wf = gamma.reshape(-1, 1) * w
    bf = beta.reshape(1, -1) @ w + b.reshape(1, -1)
    return wf, bf


def _choose_batches_per_block(batch, rows_per_batch, target_rows=512):
    """Pick batches-per-block so row tiles are big, but keep >=2 grid blocks
    (v7x has 2 TensorCores; a single parallel block would idle one of them)."""
    bp = max(1, min(batch, target_rows // max(1, rows_per_batch)))
    if batch >= 2:
        bp = min(bp, batch // 2)
    bp = max(1, bp)
    while batch % bp != 0:      # even split keeps BlockSpecs static
        bp -= 1
    return bp


def base_moe_forward(x, params):
    """x: (B, E, S, Din) float32 -> (B, S, output_dim) float32 softmax probs."""
    B, E, S, Din = x.shape
    O = params["w_out"].shape[1]

    assert S % 8 == 0, "seq_len must be a multiple of 8 for the static endpoint-mean slices"
    # TODO(synk): for seq_len not a multiple of 8, pad S or switch the endpoint
    # mean to a reshape+sum path (perf-only concern, not hit at current shapes).

    # Fold every LayerNorm affine into the *following* Linear.  The endpoint
    # mean commutes with the per-feature affine, so folding g2/bt2 into the
    # output Linear is exact.
    w0, b0 = _fold_ln_into_linear(params["g_in"], params["b_in"], params["w0"], params["bi0"])
    w1, b1 = _fold_ln_into_linear(params["g0"], params["bt0"], params["w1"], params["bi1"])
    w2, b2 = _fold_ln_into_linear(params["g1"], params["bt1"], params["w2"], params["bi2"])
    w_out, b_out = _fold_ln_into_linear(params["g2"], params["bt2"], params["w_out"], params["b_out"])

    # Pad output_dim to a lane multiple (128): lane-dense stores and a dense
    # lane tile for the softmax max/sum.  Padded logits get bias -1e30 -> exp=0.
    Opad = ((O + 127) // 128) * 128
    if Opad != O:
        w_out = jnp.pad(w_out, ((0, 0), (0, Opad - O)))
        b_out = jnp.pad(b_out, ((0, 0), (0, Opad - O)), constant_values=_NEG_BIG)

    # Fold batch into the row axis; grid over row blocks.
    rows_per_batch = E * S
    bp = _choose_batches_per_block(B, rows_per_batch)
    grid = (B // bp,)
    rows_per_block = bp * rows_per_batch

    x2d = x.reshape(B * E * S, Din)     # glue reshape in plain JAX

    param_list = [w0, b0, w1, b1, w2, b2, w_out, b_out]

    def full_spec(p):
        nd = p.ndim
        return pl.BlockSpec(p.shape, lambda i, _nd=nd: (0,) * _nd)

    in_specs = [pl.BlockSpec((rows_per_block, Din), lambda i: (i, 0))]
    in_specs += [full_spec(p) for p in param_list]
    out_spec = pl.BlockSpec((bp * S, Opad), lambda i: (i, 0))

    kernel = functools.partial(base_moe_kernel, num_endpoints=E, seq_len=S,
                               batches_per_block=bp)

    out = pl.pallas_call(
        kernel,
        out_shape=jax.ShapeDtypeStruct((B * S, Opad), jnp.float32),
        grid_spec=pltpu.PrefetchScalarGridSpec(
            num_scalar_prefetch=0,
            grid=grid,
            in_specs=in_specs,
            out_specs=out_spec,
        ),
        compiler_params=pltpu.CompilerParams(
            dimension_semantics=("parallel",)),
    )(x2d, *param_list)

    return out.reshape(B, S, Opad)[..., :O]


def init_params(key, input_dim, hidden_dims, output_dim):
    """Torch-shaped init (Linear: U(-1/sqrt(fan_in), +)); LN affines are given a
    small random perturbation so the LN->Linear folding path is actually
    exercised by the correctness check (forward semantics are unaffected)."""
    params = {}
    dims = [input_dim] + list(hidden_dims)

    keys = jax.random.split(key, 4 * (len(hidden_dims) + 1) + 2)
    ki = 0

    # input LayerNorm affine
    params["g_in"] = 1.0 + 0.1 * jax.random.normal(keys[ki], (1, input_dim), jnp.float32)
    params["b_in"] = 0.1 * jax.random.normal(keys[ki + 1], (1, input_dim), jnp.float32)
    ki += 2

    for i in range(len(hidden_dims)):
        fan_in, fan_out = dims[i], dims[i + 1]
        bound = 1.0 / math.sqrt(fan_in)
        params[f"w{i}"] = jax.random.uniform(
            keys[ki], (fan_in, fan_out), jnp.float32, -bound, bound)
        params[f"bi{i}"] = jax.random.uniform(
            keys[ki + 1], (1, fan_out), jnp.float32, -bound, bound)
        params[f"g{i}"] = 1.0 + 0.1 * jax.random.normal(keys[ki + 2], (1, fan_out), jnp.float32)
        params[f"bt{i}"] = 0.1 * jax.random.normal(keys[ki + 3], (1, fan_out), jnp.float32)
        ki += 4

    fan_in = hidden_dims[-1]
    bound = 1.0 / math.sqrt(fan_in)
    params["w_out"] = jax.random.uniform(
        keys[ki], (fan_in, output_dim), jnp.float32, -bound, bound)
    params["b_out"] = jax.random.uniform(
        keys[ki + 1], (1, output_dim), jnp.float32, -bound, bound)
    return params


def reference_forward(x, params, hidden_dims):
    """Pure-JAX reference matching the PyTorch forward (unfolded params)."""
    def ln(v, g, b):
        mean = jnp.mean(v, axis=-1, keepdims=True)
        var = jnp.sum((v - mean) ** 2, axis=-1, keepdims=True) / (v.shape[-1] - 1)
        return g * (v - mean) / (jnp.sqrt(var) + EPS) + b

    h = ln(x, params["g_in"], params["b_in"])
    for i in range(len(hidden_dims)):
        h = jnp.einsum("besd,dh->besh", h, params[f"w{i}"]) + params[f"bi{i}"]
        h = jnp.where(h > 0, h, jnp.expm1(h))       # torch.nn.ELU
        h = ln(h, params[f"g{i}"], params[f"bt{i}"])
    h = h.mean(axis=1)
    logits = jnp.einsum("bsd,do->bso", h, params["w_out"]) + params["b_out"]
    return jax.nn.softmax(logits, axis=-1)


if __name__ == "__main__":
    key = jax.random.PRNGKey(0)
    k_x, k_p = jax.random.split(key)

    # module defaults for feature dims, small batch/endpoint/seq dims
    input_dim, hidden_dims, output_dim = 10, [128, 64, 32], 1000
    B, E, S = 2, 4, 8

    x = jax.random.normal(k_x, (B, E, S, input_dim), jnp.float32)
    params = init_params(k_p, input_dim, hidden_dims, output_dim)

    out = base_moe_forward(x, params)
    out = jax.block_until_ready(out)

    ref = reference_forward(x, params, hidden_dims)
    assert out.shape == (B, S, output_dim)
    assert jnp.allclose(out, ref, atol=2e-3, rtol=2e-2)
    assert jnp.allclose(out.sum(-1), 1.0, atol=1e-3)

    print("KERNEL_OK")
</pallas_src>

<mosaic_0001>
module attributes {stable_mosaic.version = 11 : i64} {
  func.func @base_moe_kernel(%arg0: i32, %arg1: memref<32x10xf32, #tpu.memory_space<vmem>>, %arg2: memref<10x128xf32, #tpu.memory_space<vmem>>, %arg3: memref<1x128xf32, #tpu.memory_space<vmem>>, %arg4: memref<128x64xf32, #tpu.memory_space<vmem>>, %arg5: memref<1x64xf32, #tpu.memory_space<vmem>>, %arg6: memref<64x32xf32, #tpu.memory_space<vmem>>, %arg7: memref<1x32xf32, #tpu.memory_space<vmem>>, %arg8: memref<32x1024xf32, #tpu.memory_space<vmem>>, %arg9: memref<1x1024xf32, #tpu.memory_space<vmem>>, %arg10: memref<8x1024xf32, #tpu.memory_space<vmem>>) attributes {dimension_semantics = [#tpu.dimension_semantics<parallel>], iteration_bounds = array<i64: 2>, scalar_prefetch = 0 : i64, scratch_operands = 0 : i64, tpu.core_type = #tpu.core_type<tc>, window_params = [{transform_indices = @transform_0, window_bounds = array<i64: 32, 10>}, {pipeline_mode = #tpu.pipeline_mode<synchronous>, transform_indices = @transform_1, window_bounds = array<i64: 10, 128>}, {pipeline_mode = #tpu.pipeline_mode<synchronous>, transform_indices = @transform_2, window_bounds = array<i64: 1, 128>}, {pipeline_mode = #tpu.pipeline_mode<synchronous>, transform_indices = @transform_3, window_bounds = array<i64: 128, 64>}, {pipeline_mode = #tpu.pipeline_mode<synchronous>, transform_indices = @transform_4, window_bounds = array<i64: 1, 64>}, {pipeline_mode = #tpu.pipeline_mode<synchronous>, transform_indices = @transform_5, window_bounds = array<i64: 64, 32>}, {pipeline_mode = #tpu.pipeline_mode<synchronous>, transform_indices = @transform_6, window_bounds = array<i64: 1, 32>}, {pipeline_mode = #tpu.pipeline_mode<synchronous>, transform_indices = @transform_7, window_bounds = array<i64: 32, 1024>}, {pipeline_mode = #tpu.pipeline_mode<synchronous>, transform_indices = @transform_8, window_bounds = array<i64: 1, 1024>}, {transform_indices = @transform_9, window_bounds = array<i64: 8, 1024>}]} {
    %c0 = arith.constant 0 : index
    %c0_0 = arith.constant 0 : index
    %0 = vector.load %arg1[%c0, %c0_0] : memref<32x10xf32, #tpu.memory_space<vmem>>, vector<32x10xf32>
    %cst = arith.constant dense<0.000000e+00> : vector<32xf32>
    %1 = vector.multi_reduction <add>, %0, %cst [1] : vector<32x10xf32> to vector<32xf32>
    %2 = vector.shape_cast %1 : vector<32xf32> to vector<32x1xf32>
    %cst_1 = arith.constant 1.000000e+01 : f32
    %3 = vector.broadcast %cst_1 : f32 to vector<32x1xf32>
    %4 = arith.divf %2, %3 : vector<32x1xf32>
    %5 = vector.broadcast %4 : vector<32x1xf32> to vector<32x10xf32>
    %6 = arith.subf %0, %5 : vector<32x10xf32>
    %7 = arith.mulf %6, %6 : vector<32x10xf32>
    %cst_2 = arith.constant dense<0.000000e+00> : vector<32xf32>
    %8 = vector.multi_reduction <add>, %7, %cst_2 [1] : vector<32x10xf32> to vector<32xf32>
    %9 = vector.shape_cast %8 : vector<32xf32> to vector<32x1xf32>
    %cst_3 = arith.constant 0.111111112 : f32
    %10 = vector.broadcast %cst_3 : f32 to vector<32x1xf32>
    %11 = arith.mulf %9, %10 : vector<32x1xf32>
    %12 = math.sqrt %11 : vector<32x1xf32>
    %13 = vector.broadcast %4 : vector<32x1xf32> to vector<32x10xf32>
    %14 = arith.subf %0, %13 : vector<32x10xf32>
    %cst_4 = arith.constant 9.99999997E-7 : f32
    %15 = vector.broadcast %cst_4 : f32 to vector<32x1xf32>
    %16 = arith.addf %12, %15 : vector<32x1xf32>
    %cst_5 = arith.constant 1.000000e+00 : f32
    %17 = vector.broadcast %cst_5 : f32 to vector<32x1xf32>
    %18 = arith.divf %17, %16 : vector<32x1xf32>
    %19 = vector.broadcast %18 : vector<32x1xf32> to vector<32x10xf32>
    %20 = arith.mulf %14, %19 : vector<32x10xf32>
    %c0_6 = arith.constant 0 : index
    %c0_7 = arith.constant 0 : index
    %21 = vector.load %arg2[%c0_6, %c0_7] : memref<10x128xf32, #tpu.memory_space<vmem>>, vector<10x128xf32>
    %cst_8 = arith.constant dense<0.000000e+00> : vector<32x128xf32>
    %22 = tpu.matmul %20, %21, %cst_8 {dimension_numbers = #tpu.dot_dimension_numbers<[1], [0], [0], [1], [0, 0, 1, 1], [], []>} : vector<32x10xf32>, vector<10x128xf32>, vector<32x128xf32> -> vector<32x128xf32>
    %c0_9 = arith.constant 0 : index
    %c0_10 = arith.constant 0 : index
    %23 = vector.load %arg3[%c0_9, %c0_10] : memref<1x128xf32, #tpu.memory_space<vmem>>, vector<1x128xf32>
    %24 = vector.broadcast %23 : vector<1x128xf32> to vector<32x128xf32>
    %25 = arith.addf %22, %24 : vector<32x128xf32>
    %cst_11 = arith.constant 0.000000e+00 : f32
    %26 = vector.broadcast %cst_11 : f32 to vector<32x128xf32>
    %27 = arith.cmpf ogt, %25, %26 : vector<32x128xf32>
    %28 = math.exp %25 : vector<32x128xf32>
    %cst_12 = arith.constant 1.000000e+00 : f32
    %29 = vector.broadcast %cst_12 : f32 to vector<32x128xf32>
    %30 = arith.subf %28, %29 : vector<32x128xf32>
    %31 = arith.select %27, %25, %30 : vector<32x128xi1>, vector<32x128xf32>
    %cst_13 = arith.constant dense<0.000000e+00> : vector<32xf32>
    %32 = vector.multi_reduction <add>, %31, %cst_13 [1] : vector<32x128xf32> to vector<32xf32>
    %33 = vector.shape_cast %32 : vector<32xf32> to vector<32x1xf32>
    %cst_14 = arith.constant 1.280000e+02 : f32
    %34 = vector.broadcast %cst_14 : f32 to vector<32x1xf32>
    %35 = arith.divf %33, %34 : vector<32x1xf32>
    %36 = vector.broadcast %35 : vector<32x1xf32> to vector<32x128xf32>
    %37 = arith.subf %31, %36 : vector<32x128xf32>
    %38 = arith.mulf %37, %37 : vector<32x128xf32>
    %cst_15 = arith.constant dense<0.000000e+00> : vector<32xf32>
    %39 = vector.multi_reduction <add>, %38, %cst_15 [1] : vector<32x128xf32> to vector<32xf32>
    %40 = vector.shape_cast %39 : vector<32xf32> to vector<32x1xf32>
    %cst_16 = arith.constant 0.00787401571 : f32
    %41 = vector.broadcast %cst_16 : f32 to vector<32x1xf32>
    %42 = arith.mulf %40, %41 : vector<32x1xf32>
    %43 = math.sqrt %42 : vector<32x1xf32>
    %44 = vector.broadcast %35 : vector<32x1xf32> to vector<32x128xf32>
    %45 = arith.subf %31, %44 : vector<32x128xf32>
    %cst_17 = arith.constant 9.99999997E-7 : f32
    %46 = vector.broadcast %cst_17 : f32 to vector<32x1xf32>
    %47 = arith.addf %43, %46 : vector<32x1xf32>
    %cst_18 = arith.constant 1.000000e+00 : f32
    %48 = vector.broadcast %cst_18 : f32 to vector<32x1xf32>
    %49 = arith.divf %48, %47 : vector<32x1xf32>
    %50 = vector.broadcast %49 : vector<32x1xf32> to vector<32x128xf32>
    %51 = arith.mulf %45, %50 : vector<32x128xf32>
    %c0_19 = arith.constant 0 : index
    %c0_20 = arith.constant 0 : index
    %52 = vector.load %arg4[%c0_19, %c0_20] : memref<128x64xf32, #tpu.memory_space<vmem>>, vector<128x64xf32>
    %cst_21 = arith.constant dense<0.000000e+00> : vector<32x64xf32>
    %53 = tpu.matmul %51, %52, %cst_21 {dimension_numbers = #tpu.dot_dimension_numbers<[1], [0], [0], [1], [0, 0, 1, 1], [], []>} : vector<32x128xf32>, vector<128x64xf32>, vector<32x64xf32> -> vector<32x64xf32>
    %c0_22 = arith.constant 0 : index
    %c0_23 = arith.constant 0 : index
    %54 = vector.load %arg5[%c0_22, %c0_23] : memref<1x64xf32, #tpu.memory_space<vmem>>, vector<1x64xf32>
    %55 = vector.broadcast %54 : vector<1x64xf32> to vector<32x64xf32>
    %56 = arith.addf %53, %55 : vector<32x64xf32>
    %cst_24 = arith.constant 0.000000e+00 : f32
    %57 = vector.broadcast %cst_24 : f32 to vector<32x64xf32>
    %58 = arith.cmpf ogt, %56, %57 : vector<32x64xf32>
    %59 = math.exp %56 : vector<32x64xf32>
    %cst_25 = arith.constant 1.000000e+00 : f32
    %60 = vector.broadcast %cst_25 : f32 to vector<32x64xf32>
    %61 = arith.subf %59, %60 : vector<32x64xf32>
    %62 = arith.select %58, %56, %61 : vector<32x64xi1>, vector<32x64xf32>
    %cst_26 = arith.constant dense<0.000000e+00> : vector<32xf32>
    %63 = vector.multi_reduction <add>, %62, %cst_26 [1] : vector<32x64xf32> to vector<32xf32>
    %64 = vector.shape_cast %63 : vector<32xf32> to vector<32x1xf32>
    %cst_27 = arith.constant 6.400000e+01 : f32
    %65 = vector.broadcast %cst_27 : f32 to vector<32x1xf32>
    %66 = arith.divf %64, %65 : vector<32x1xf32>
    %67 = vector.broadcast %66 : vector<32x1xf32> to vector<32x64xf32>
    %68 = arith.subf %62, %67 : vector<32x64xf32>
    %69 = arith.mulf %68, %68 : vector<32x64xf32>
    %cst_28 = arith.constant dense<0.000000e+00> : vector<32xf32>
    %70 = vector.multi_reduction <add>, %69, %cst_28 [1] : vector<32x64xf32> to vector<32xf32>
    %71 = vector.shape_cast %70 : vector<32xf32> to vector<32x1xf32>
    %cst_29 = arith.constant 0.0158730168 : f32
    %72 = vector.broadcast %cst_29 : f32 to vector<32x1xf32>
    %73 = arith.mulf %71, %72 : vector<32x1xf32>
    %74 = math.sqrt %73 : vector<32x1xf32>
    %75 = vector.broadcast %66 : vector<32x1xf32> to vector<32x64xf32>
    %76 = arith.subf %62, %75 : vector<32x64xf32>
    %cst_30 = arith.constant 9.99999997E-7 : f32
    %77 = vector.broadcast %cst_30 : f32 to vector<32x1xf32>
    %78 = arith.addf %74, %77 : vector<32x1xf32>
    %cst_31 = arith.constant 1.000000e+00 : f32
    %79 = vector.broadcast %cst_31 : f32 to vector<32x1xf32>
    %80 = arith.divf %79, %78 : vector<32x1xf32>
    %81 = vector.broadcast %80 : vector<32x1xf32> to vector<32x64xf32>
    %82 = arith.mulf %76, %81 : vector<32x64xf32>
    %c0_32 = arith.constant 0 : index
    %c0_33 = arith.constant 0 : index
    %83 = vector.load %arg6[%c0_32, %c0_33] : memref<64x32xf32, #tpu.memory_space<vmem>>, vector<64x32xf32>
    %cst_34 = arith.constant dense<0.000000e+00> : vector<32x32xf32>
    %84 = tpu.matmul %82, %83, %cst_34 {dimension_numbers = #tpu.dot_dimension_numbers<[1], [0], [0], [1], [0, 0, 1, 1], [], []>} : vector<32x64xf32>, vector<64x32xf32>, vector<32x32xf32> -> vector<32x32xf32>
    %c0_35 = arith.constant 0 : index
    %c0_36 = arith.constant 0 : index
    %85 = vector.load %arg7[%c0_35, %c0_36] : memref<1x32xf32, #tpu.memory_space<vmem>>, vector<1x32xf32>
    %86 = vector.broadcast %85 : vector<1x32xf32> to vector<32x32xf32>
    %87 = arith.addf %84, %86 : vector<32x32xf32>
    %cst_37 = arith.constant 0.000000e+00 : f32
    %88 = vector.broadcast %cst_37 : f32 to vector<32x32xf32>
    %89 = arith.cmpf ogt, %87, %88 : vector<32x32xf32>
    %90 = math.exp %87 : vector<32x32xf32>
    %cst_38 = arith.constant 1.000000e+00 : f32
    %91 = vector.broadcast %cst_38 : f32 to vector<32x32xf32>
    %92 = arith.subf %90, %91 : vector<32x32xf32>
    %93 = arith.select %89, %87, %92 : vector<32x32xi1>, vector<32x32xf32>
    %cst_39 = arith.constant dense<0.000000e+00> : vector<32xf32>
    %94 = vector.multi_reduction <add>, %93, %cst_39 [1] : vector<32x32xf32> to vector<32xf32>
    %95 = vector.shape_cast %94 : vector<32xf32> to vector<32x1xf32>
    %cst_40 = arith.constant 3.200000e+01 : f32
    %96 = vector.broadcast %cst_40 : f32 to vector<32x1xf32>
    %97 = arith.divf %95, %96 : vector<32x1xf32>
    %98 = vector.broadcast %97 : vector<32x1xf32> to vector<32x32xf32>
    %99 = arith.subf %93, %98 : vector<32x32xf32>
    %100 = arith.mulf %99, %99 : vector<32x32xf32>
    %cst_41 = arith.constant dense<0.000000e+00> : vector<32xf32>
    %101 = vector.multi_reduction <add>, %100, %cst_41 [1] : vector<32x32xf32> to vector<32xf32>
    %102 = vector.shape_cast %101 : vector<32xf32> to vector<32x1xf32>
    %cst_42 = arith.constant 0.0322580636 : f32
    %103 = vector.broadcast %cst_42 : f32 to vector<32x1xf32>
    %104 = arith.mulf %102, %103 : vector<32x1xf32>
    %105 = math.sqrt %104 : vector<32x1xf32>
    %106 = vector.broadcast %97 : vector<32x1xf32> to vector<32x32xf32>
    %107 = arith.subf %93, %106 : vector<32x32xf32>
    %cst_43 = arith.constant 9.99999997E-7 : f32
    %108 = vector.broadcast %cst_43 : f32 to vector<32x1xf32>
    %109 = arith.addf %105, %108 : vector<32x1xf32>
    %cst_44 = arith.constant 1.000000e+00 : f32
    %110 = vector.broadcast %cst_44 : f32 to vector<32x1xf32>
    %111 = arith.divf %110, %109 : vector<32x1xf32>
    %112 = vector.broadcast %111 : vector<32x1xf32> to vector<32x32xf32>
    %113 = arith.mulf %107, %112 : vector<32x32xf32>
    %114 = vector.extract_strided_slice %113 {offsets = [0, 0], sizes = [8, 32], strides = [1, 1]} : vector<32x32xf32> to vector<8x32xf32>
    %115 = vector.extract_strided_slice %113 {offsets = [8, 0], sizes = [8, 32], strides = [1, 1]} : vector<32x32xf32> to vector<8x32xf32>
    %116 = arith.addf %114, %115 : vector<8x32xf32>
    %117 = vector.extract_strided_slice %113 {offsets = [16, 0], sizes = [8, 32], strides = [1, 1]} : vector<32x32xf32> to vector<8x32xf32>
    %118 = arith.addf %116, %117 : vector<8x32xf32>
    %119 = vector.extract_strided_slice %113 {offsets = [24, 0], sizes = [8, 32], strides = [1, 1]} : vector<32x32xf32> to vector<8x32xf32>
    %120 = arith.addf %118, %119 : vector<8x32xf32>
    %cst_45 = arith.constant 2.500000e-01 : f32
    %121 = vector.broadcast %cst_45 : f32 to vector<8x32xf32>
    %122 = arith.mulf %120, %121 : vector<8x32xf32>
    %c0_46 = arith.constant 0 : index
    %c0_47 = arith.constant 0 : index
    %123 = vector.load %arg8[%c0_46, %c0_47] : memref<32x1024xf32, #tpu.memory_space<vmem>>, vector<32x1024xf32>
    %cst_48 = arith.constant dense<0.000000e+00> : vector<8x1024xf32>
    %124 = tpu.matmul %122, %123, %cst_48 {dimension_numbers = #tpu.dot_dimension_numbers<[1], [0], [0], [1], [0, 0, 1, 1], [], []>} : vector<8x32xf32>, vector<32x1024xf32>, vector<8x1024xf32> -> vector<8x1024xf32>
    %c0_49 = arith.constant 0 : index
    %c0_50 = arith.constant 0 : index
    %125 = vector.load %arg9[%c0_49, %c0_50] : memref<1x1024xf32, #tpu.memory_space<vmem>>, vector<1x1024xf32>
    %126 = vector.broadcast %125 : vector<1x1024xf32> to vector<8x1024xf32>
    %127 = arith.addf %124, %126 : vector<8x1024xf32>
    %cst_51 = arith.constant dense<0xFF800000> : vector<8xf32>
    %128 = vector.multi_reduction <maximumf>, %127, %cst_51 [1] : vector<8x1024xf32> to vector<8xf32>
    %129 = vector.shape_cast %128 : vector<8xf32> to vector<8x1xf32>
    %130 = vector.broadcast %129 : vector<8x1xf32> to vector<8x1024xf32>
    %131 = arith.subf %127, %130 : vector<8x1024xf32>
    %132 = math.exp %131 : vector<8x1024xf32>
    %cst_52 = arith.constant dense<0.000000e+00> : vector<8xf32>
    %133 = vector.multi_reduction <add>, %132, %cst_52 [1] : vector<8x1024xf32> to vector<8xf32>
    %134 = vector.shape_cast %133 : vector<8xf32> to vector<8x1xf32>
    %cst_53 = arith.constant 1.000000e+00 : f32
    %135 = vector.broadcast %cst_53 : f32 to vector<8x1xf32>
    %136 = arith.divf %135, %134 : vector<8x1xf32>
    %137 = vector.broadcast %136 : vector<8x1xf32> to vector<8x1024xf32>
    %138 = arith.mulf %132, %137 : vector<8x1024xf32>
    %c0_54 = arith.constant 0 : index
    %c0_55 = arith.constant 0 : index
    %139 = vector.load %arg10[%c0_54, %c0_55] : memref<8x1024xf32, #tpu.memory_space<vmem>>, vector<8x1024xf32>
    tpu.vector_store %arg10[%c0_54, %c0_55], %138 {strides = array<i32>} : memref<8x1024xf32, #tpu.memory_space<vmem>>, vector<8x1024xf32>,
    return
  }
  func.func @transform_0(%arg0: i32) -> (i32, i32) {
    %c0_i32 = arith.constant 0 : i32
    %c0_i32_0 = arith.constant 0 : i32
    return %arg0, %c0_i32 : i32, i32
  }
  func.func @transform_1(%arg0: i32) -> (i32, i32) {
    %c0_i32 = arith.constant 0 : i32
    %c0_i32_0 = arith.constant 0 : i32
    %c0_i32_1 = arith.constant 0 : i32
    return %c0_i32, %c0_i32_0 : i32, i32
  }
  func.func @transform_2(%arg0: i32) -> (i32, i32) {
    %c0_i32 = arith.constant 0 : i32
    %c0_i32_0 = arith.constant 0 : i32
    %c0_i32_1 = arith.constant 0 : i32
    return %c0_i32, %c0_i32_0 : i32, i32
  }
  func.func @transform_3(%arg0: i32) -> (i32, i32) {
    %c0_i32 = arith.constant 0 : i32
    %c0_i32_0 = arith.constant 0 : i32
    %c0_i32_1 = arith.constant 0 : i32
    return %c0_i32, %c0_i32_0 : i32, i32
  }
  func.func @transform_4(%arg0: i32) -> (i32, i32) {
    %c0_i32 = arith.constant 0 : i32
    %c0_i32_0 = arith.constant 0 : i32
    %c0_i32_1 = arith.constant 0 : i32
    return %c0_i32, %c0_i32_0 : i32, i32
  }
  func.func @transform_5(%arg0: i32) -> (i32, i32) {
    %c0_i32 = arith.constant 0 : i32
    %c0_i32_0 = arith.constant 0 : i32
    %c0_i32_1 = arith.constant 0 : i32
    return %c0_i32, %c0_i32_0 : i32, i32
  }
  func.func @transform_6(%arg0: i32) -> (i32, i32) {
    %c0_i32 = arith.constant 0 : i32
    %c0_i32_0 = arith.constant 0 : i32
    %c0_i32_1 = arith.constant 0 : i32
    return %c0_i32, %c0_i32_0 : i32, i32
  }
  func.func @transform_7(%arg0: i32) -> (i32, i32) {
    %c0_i32 = arith.constant 0 : i32
    %c0_i32_0 = arith.constant 0 : i32
    %c0_i32_1 = arith.constant 0 : i32
    return %c0_i32, %c0_i32_0 : i32, i32
  }
  func.func @transform_8(%arg0: i32) -> (i32, i32) {
    %c0_i32 = arith.constant 0 : i32
    %c0_i32_0 = arith.constant 0 : i32
    %c0_i32_1 = arith.constant 0 : i32
    return %c0_i32, %c0_i32_0 : i32, i32
  }
  func.func @transform_9(%arg0: i32) -> (i32, i32) {
    %c0_i32 = arith.constant 0 : i32
    %c0_i32_0 = arith.constant 0 : i32
    return %arg0, %c0_i32 : i32, i32
  }
}

</mosaic_0001>

<llo_original>
// kernel: tpu_custom_call.1
$region0: #{tpu_custom_call.1}
  #allocation0 [shape = 'u32[]', space=smem, size = 0x4, offset = 0x4, fixed_abs, tag = 'smem constant byte address 0x4 - core index']
  #allocation1 [shape = 'u32[72,128]{1,0:T(1,128)}', space=vmem, size = 0x9000, scoped, tag = 'internal scratch']
  %s0 = inlined_call_operand.vmem [shape: f32[64,10], index: 0, kind: input, shape index: {}]
  %s1 = inlined_call_operand.vmem [shape: f32[10,128], index: 1, kind: input, shape index: {}]
  %s2 = inlined_call_operand.vmem [shape: f32[1,128], index: 2, kind: input, shape index: {}]
  %s3 = inlined_call_operand.vmem [shape: f32[128,64], index: 3, kind: input, shape index: {}]
  %s4 = inlined_call_operand.vmem [shape: f32[1,64], index: 4, kind: input, shape index: {}]
  %s5 = inlined_call_operand.vmem [shape: f32[64,32], index: 5, kind: input, shape index: {}]
  %s6 = inlined_call_operand.vmem [shape: f32[1,32], index: 6, kind: input, shape index: {}]
  %s7 = inlined_call_operand.hbm [shape: f32[32,1024], index: 7, kind: input, shape index: {}]
  %s8 = inlined_call_operand.vmem [shape: f32[1,1024], index: 8, kind: input, shape index: {}]
  %s9 = inlined_call_operand.hbm [shape: f32[16,1024], index: 9, kind: output, shape index: {}]
  %s10 = sld [smem:[#allocation0]]
  $region73: #{tpu_custom_call.1} parent=0
    _
  %s12 = ssub.s32 1, %s10
  %s13 = scalar_select 0, %s12, %s10
  $region1: #{tpu_custom_call.1} parent=0
    #allocation2 [shape = 'u8[131072]{0}', space=vmem, size = 0x20000, scoped, tag = 'input window, operand 7, single buffered']
    #allocation3 [shape = 's32[2]{0}', space=sflag, size = 0x8, scoped, tag = 'scoped memory for tpu_custom_call.1']
    #allocation4 [shape = 's32[2]{0}', space=sflag, size = 0x8, scoped, tag = 'scoped memory for tpu_custom_call.1']
    #allocation5 [shape = 'u8[65536]{0}', space=vmem, size = 0x10000, scoped, tag = 'output window, operand 0']
    %14 = vsyncpa [#allocation3], 0
    %15 = vsyncpa [#allocation4], 0
    %s16 = scalar_lea.sflag [#allocation4], 1
    %17 = vsyncpa %s16, 0
    loop: start=0, step=1, limit=4
    $region2: #{tpu_custom_call.1} parent=1 // loop_pre_header
      _
    $region3: #{tpu_custom_call.1} parent=1 // loop_header
      %s19 = sphi 0, %s23
      %p20 = scmp.ge.s32.totalorder %s19, 4
      %s29 = sphi 0, %s31
      %s32 = sphi 0, %s29
      %s33 = sphi 0, %s32
      %s49 = sphi 0, %s33
      %s53 = sphi 0, %s53
      %s55 = sphi 0, %s53
      %s56 = sphi 0, %s55
      %s70 = sphi 0, %s56
      %s74 = sphi 0, %s74
      %s76 = sphi 0, %s74
      %s77 = sphi 0, %s76
      %s91 = sphi 0, %s77
      %s95 = sphi 0, %s95
      %s97 = sphi 0, %s95
      %s98 = sphi 0, %s97
      %s112 = sphi 0, %s98
      %s116 = sphi 0, %s116
      %s118 = sphi 0, %s116
      %s119 = sphi 0, %s118
      %s133 = sphi 0, %s119
      %s137 = sphi 0, %s137
      %s139 = sphi 0, %s137
      %s140 = sphi 0, %s139
      %s154 = sphi 0, %s140
      %s158 = sphi 0, %s158
      %s160 = sphi 0, %s158
      %s161 = sphi 0, %s160
      %s175 = sphi 0, %s161
      %s179 = sphi 0, %s179
      %s181 = sphi 0, %s179
      %s182 = sphi 0, %s181
      %s196 = sphi 0, %s182
      %s200 = sphi 0, %s200
      %s202 = sphi 0, %s200
      %s203 = sphi 0, %s202
      %s217 = sphi 0, %s203
      %s223 = sphi 0, %s225
      %s226 = sphi 0, %s223
      %s227 = sphi 0, %s226
      %s243 = sphi 0, %s227
    $region4: #{tpu_custom_call.1} parent=1 // loop_header_branch
      %22 = sbr.rel (%p20) target = $region8
    $region5: #{tpu_custom_call.1} parent=1 // loop_body
      %s24 = ssub.s32 %s19, 1
      %s25 = ssub.s32 %s19, 2
      %s26 = sadd.s32 %s19, 1
      %s27 = ssub.s32 %s19, %s26
      %p28 = scmp.eq.s32.totalorder %s27, 0
      %s30 = sadd.s32 %s29, 1
      %s31 = scalar_select %p28, %s29, %s30
      %p34 = pneg %p28
      %p35 = scmp.eq.s32.totalorder %s19, 1
      %p36 = por %p34, %p35
      %p37 = scmp.ne.s32.totalorder %s29, %s32
      %p38 = scmp.eq.s32.totalorder %s19, 0
      %p39 = por %p37, %p38
      %p40 = scmp.ne.s32.totalorder %s29, %s32
      %p41 = scmp.eq.s32.totalorder %s24, 1
      %p42 = por %p40, %p41
      %p43 = scmp.ne.s32.totalorder %s32, %s33
      %p44 = scmp.eq.s32.totalorder %s24, 0
      %p45 = por %p43, %p44
      %p46 = scmp.ne.s32.totalorder %s32, %s33
      %p47 = scmp.eq.s32.totalorder %s25, 1
      %p48 = por %p46, %p47
      %p50 = scmp.ne.s32.totalorder %s33, %s49
      %p51 = scmp.eq.s32.totalorder %s25, 0
      %p52 = por %p50, %p51
      %s54 = sadd.s32 %s53, 1
      %p57 = scmp.eq.s32.totalorder %s19, 1
      %p58 = scmp.ne.s32.totalorder %s53, %s55
      %p59 = scmp.eq.s32.totalorder %s19, 0
      %p60 = por %p58, %p59
      %p61 = scmp.ne.s32.totalorder %s53, %s55
      %p62 = scmp.eq.s32.totalorder %s24, 1
      %p63 = por %p61, %p62
      %p64 = scmp.ne.s32.totalorder %s55, %s56
      %p65 = scmp.eq.s32.totalorder %s24, 0
      %p66 = por %p64, %p65
      %p67 = scmp.ne.s32.totalorder %s55, %s56
      %p68 = scmp.eq.s32.totalorder %s25, 1
      %p69 = por %p67, %p68
      %p71 = scmp.ne.s32.totalorder %s56, %s70
      %p72 = scmp.eq.s32.totalorder %s25, 0
      %p73 = por %p71, %p72
      %s75 = sadd.s32 %s74, 1
      %p78 = scmp.eq.s32.totalorder %s19, 1
      %p79 = scmp.ne.s32.totalorder %s74, %s76
      %p80 = scmp.eq.s32.totalorder %s19, 0
      %p81 = por %p79, %p80
      %p82 = scmp.ne.s32.totalorder %s74, %s76
      %p83 = scmp.eq.s32.totalorder %s24, 1
      %p84 = por %p82, %p83
      %p85 = scmp.ne.s32.totalorder %s76, %s77
      %p86 = scmp.eq.s32.totalorder %s24, 0
      %p87 = por %p85, %p86
      %p88 = scmp.ne.s32.totalorder %s76, %s77
      %p89 = scmp.eq.s32.totalorder %s25, 1
      %p90 = por %p88, %p89
      %p92 = scmp.ne.s32.totalorder %s77, %s91
      %p93 = scmp.eq.s32.totalorder %s25, 0
      %p94 = por %p92, %p93
      %s96 = sadd.s32 %s95, 1
      %p99 = scmp.eq.s32.totalorder %s19, 1
      %p100 = scmp.ne.s32.totalorder %s95, %s97
      %p101 = scmp.eq.s32.totalorder %s19, 0
      %p102 = por %p100, %p101
      %p103 = scmp.ne.s32.totalorder %s95, %s97
      %p104 = scmp.eq.s32.totalorder %s24, 1
      %p105 = por %p103, %p104
      %p106 = scmp.ne.s32.totalorder %s97, %s98
      %p107 = scmp.eq.s32.totalorder %s24, 0
      %p108 = por %p106, %p107
      %p109 = scmp.ne.s32.totalorder %s97, %s98
      %p110 = scmp.eq.s32.totalorder %s25, 1
      %p111 = por %p109, %p110
      %p113 = scmp.ne.s32.totalorder %s98, %s112
      %p114 = scmp.eq.s32.totalorder %s25, 0
      %p115 = por %p113, %p114
      %s117 = sadd.s32 %s116, 1
      %p120 = scmp.eq.s32.totalorder %s19, 1
      %p121 = scmp.ne.s32.totalorder %s116, %s118
      %p122 = scmp.eq.s32.totalorder %s19, 0
      %p123 = por %p121, %p122
      %p124 = scmp.ne.s32.totalorder %s116, %s118
      %p125 = scmp.eq.s32.totalorder %s24, 1
      %p126 = por %p124, %p125
      %p127 = scmp.ne.s32.totalorder %s118, %s119
      %p128 = scmp.eq.s32.totalorder %s24, 0
      %p129 = por %p127, %p128
      %p130 = scmp.ne.s32.totalorder %s118, %s119
      %p131 = scmp.eq.s32.totalorder %s25, 1
      %p132 = por %p130, %p131
      %p134 = scmp.ne.s32.totalorder %s119, %s133
      %p135 = scmp.eq.s32.totalorder %s25, 0
      %p136 = por %p134, %p135
      %s138 = sadd.s32 %s137, 1
      %p141 = scmp.eq.s32.totalorder %s19, 1
      %p142 = scmp.ne.s32.totalorder %s137, %s139
      %p143 = scmp.eq.s32.totalorder %s19, 0
      %p144 = por %p142, %p143
      %p145 = scmp.ne.s32.totalorder %s137, %s139
      %p146 = scmp.eq.s32.totalorder %s24, 1
      %p147 = por %p145, %p146
      %p148 = scmp.ne.s32.totalorder %s139, %s140
      %p149 = scmp.eq.s32.totalorder %s24, 0
      %p150 = por %p148, %p149
      %p151 = scmp.ne.s32.totalorder %s139, %s140
      %p152 = scmp.eq.s32.totalorder %s25, 1
      %p153 = por %p151, %p152
      %p155 = scmp.ne.s32.totalorder %s140, %s154
      %p156 = scmp.eq.s32.totalorder %s25, 0
      %p157 = por %p155, %p156
      %s159 = sadd.s32 %s158, 1
      %p162 = scmp.eq.s32.totalorder %s19, 1
      %p163 = scmp.ne.s32.totalorder %s158, %s160
      %p164 = scmp.eq.s32.totalorder %s19, 0
      %p165 = por %p163, %p164
      %p166 = scmp.ne.s32.totalorder %s158, %s160
      %p167 = scmp.eq.s32.totalorder %s24, 1
      %p168 = por %p166, %p167
      %p169 = scmp.ne.s32.totalorder %s160, %s161
      %p170 = scmp.eq.s32.totalorder %s24, 0
      %p171 = por %p169, %p170
      %p172 = scmp.ne.s32.totalorder %s160, %s161
      %p173 = scmp.eq.s32.totalorder %s25, 1
      %p174 = por %p172, %p173
      %p176 = scmp.ne.s32.totalorder %s161, %s175
      %p177 = scmp.eq.s32.totalorder %s25, 0
      %p178 = por %p176, %p177
      %s180 = sadd.s32 %s179, 1
      %p183 = scmp.eq.s32.totalorder %s19, 1
      %p184 = scmp.ne.s32.totalorder %s179, %s181
      %p185 = scmp.eq.s32.totalorder %s19, 0
      %p186 = por %p184, %p185
      %p187 = scmp.ne.s32.totalorder %s179, %s181
      %p188 = scmp.eq.s32.totalorder %s24, 1
      %p189 = por %p187, %p188
      %p190 = scmp.ne.s32.totalorder %s181, %s182
      %p191 = scmp.eq.s32.totalorder %s24, 0
      %p192 = por %p190, %p191
      %p193 = scmp.ne.s32.totalorder %s181, %s182
      %p194 = scmp.eq.s32.totalorder %s25, 1
      %p195 = por %p193, %p194
      %p197 = scmp.ne.s32.totalorder %s182, %s196
      %p198 = scmp.eq.s32.totalorder %s25, 0
      %p199 = por %p197, %p198
      %s201 = sadd.s32 %s200, 1
      %p204 = scmp.eq.s32.totalorder %s19, 1
      %p205 = scmp.ne.s32.totalorder %s200, %s202
      %p206 = scmp.eq.s32.totalorder %s19, 0
      %p207 = por %p205, %p206
      %p208 = scmp.ne.s32.totalorder %s200, %s202
      %p209 = scmp.eq.s32.totalorder %s24, 1
      %p210 = por %p208, %p209
      %p211 = scmp.ne.s32.totalorder %s202, %s203
      %p212 = scmp.eq.s32.totalorder %s24, 0
      %p213 = por %p211, %p212
      %p214 = scmp.ne.s32.totalorder %s202, %s203
      %p215 = scmp.eq.s32.totalorder %s25, 1
      %p216 = por %p214, %p215
      %p218 = scmp.ne.s32.totalorder %s203, %s217
      %p219 = scmp.eq.s32.totalorder %s25, 0
      %p220 = por %p218, %p219
      %s221 = ssub.s32 %s19, %s26
      %p222 = scmp.eq.s32.totalorder %s221, 0
      %s224 = sadd.s32 %s223, 1
      %s225 = scalar_select %p222, %s223, %s224
      %p228 = pneg %p222
      %p229 = scmp.eq.s32.totalorder %s19, 1
      %p230 = por %p228, %p229
      %p231 = scmp.ne.s32.totalorder %s223, %s226
      %p232 = scmp.eq.s32.totalorder %s19, 0
      %p233 = por %p231, %p232
      %p234 = scmp.ne.s32.totalorder %s223, %s226
      %p235 = scmp.eq.s32.totalorder %s24, 1
      %p236 = por %p234, %p235
      %p237 = scmp.ne.s32.totalorder %s226, %s227
      %p238 = scmp.eq.s32.totalorder %s24, 0
      %p239 = por %p237, %p238
      %p240 = scmp.ne.s32.totalorder %s226, %s227
      %p241 = scmp.eq.s32.totalorder %s25, 1
      %p242 = por %p240, %p241
      %p244 = scmp.ne.s32.totalorder %s227, %s243
      %p245 = scmp.eq.s32.totalorder %s25, 0
      %p246 = por %p244, %p245
      %p247 = scmp.le.s32.totalorder 1, %s19
      %p248 = scmp.lt.s32.totalorder %s19, 3
      %p249 = pnand %p247, %p248
      %p250 = pneg %p249
      // Predicated region
      $region9: #{tpu_custom_call.1} parent=5 // pred_check
        _
      $region10: #{tpu_custom_call.1} parent=5 // pred_check_branch
        %252 = sbr.rel (%p249) target = $region12
      $region11: #{tpu_custom_call.1} parent=5 // pred_region
        %s253 = ssub.s32 %s19, 1
        // Predicated region
        $region13: #{tpu_custom_call.1} parent=11 // pred_check
          %p254 = pneg %p66
        $region14: #{tpu_custom_call.1} parent=11 // pred_check_branch
          %256 = sbr.rel (%p254) target = $region16
        $region15: #{tpu_custom_call.1} parent=11 // pred_region
          _
        $region16: #{tpu_custom_call.1} parent=11 // pred_fallthru
          _
        // Predicated region
        $region17: #{tpu_custom_call.1} parent=11 // pred_check
          %p257 = pneg %p87
        $region18: #{tpu_custom_call.1} parent=11 // pred_check_branch
          %259 = sbr.rel (%p257) target = $region20
        $region19: #{tpu_custom_call.1} parent=11 // pred_region
          _
        $region20: #{tpu_custom_call.1} parent=11 // pred_fallthru
          _
        // Predicated region
        $region21: #{tpu_custom_call.1} parent=11 // pred_check
          %p260 = pneg %p108
        $region22: #{tpu_custom_call.1} parent=11 // pred_check_branch
          %262 = sbr.rel (%p260) target = $region24
        $region23: #{tpu_custom_call.1} parent=11 // pred_region
          _
        $region24: #{tpu_custom_call.1} parent=11 // pred_fallthru
          _
        // Predicated region
        $region25: #{tpu_custom_call.1} parent=11 // pred_check
          %p263 = pneg %p129
        $region26: #{tpu_custom_call.1} parent=11 // pred_check_branch
          %265 = sbr.rel (%p263) target = $region28
        $region27: #{tpu_custom_call.1} parent=11 // pred_region
          _
        $region28: #{tpu_custom_call.1} parent=11 // pred_fallthru
          _
        // Predicated region
        $region29: #{tpu_custom_call.1} parent=11 // pred_check
          %p266 = pneg %p150
        $region30: #{tpu_custom_call.1} parent=11 // pred_check_branch
          %268 = sbr.rel (%p266) target = $region32
        $region31: #{tpu_custom_call.1} parent=11 // pred_region
          _
        $region32: #{tpu_custom_call.1} parent=11 // pred_fallthru
          _
        // Predicated region
        $region33: #{tpu_custom_call.1} parent=11 // pred_check
          %p269 = pneg %p171
        $region34: #{tpu_custom_call.1} parent=11 // pred_check_branch
          %271 = sbr.rel (%p269) target = $region36
        $region35: #{tpu_custom_call.1} parent=11 // pred_region
          _
        $region36: #{tpu_custom_call.1} parent=11 // pred_fallthru
          _
        // Predicated region
        $region37: #{tpu_custom_call.1} parent=11 // pred_check
          %p272 = pneg %p192
        $region38: #{tpu_custom_call.1} parent=11 // pred_check_branch
          %274 = sbr.rel (%p272) target = $region40
        $region39: #{tpu_custom_call.1} parent=11 // pred_region
          %276 = vsyncadd [#allocation3], 0
          %s277 = sshll.u32 %s7, 4
          %s278 = int_to_ptr.hbm [resolvable:$true] %s277
          %s279 = sshll.u32 [#allocation2], 4
          %s280 = int_to_ptr.vmem [resolvable:$true] %s279
          %285 = dma.hbm_to_vmem [thread:$0]  %s278, 4096, %s280, [#allocation3], 1024, 1024, 64
        $region40: #{tpu_custom_call.1} parent=11 // pred_fallthru
          _
        // Predicated region
        $region41: #{tpu_custom_call.1} parent=11 // pred_check
          %p286 = pneg %p213
        $region42: #{tpu_custom_call.1} parent=11 // pred_check_branch
          %288 = sbr.rel (%p286) target = $region44
        $region43: #{tpu_custom_call.1} parent=11 // pred_region
          _
        $region44: #{tpu_custom_call.1} parent=11 // pred_fallthru
          _
      $region12: #{tpu_custom_call.1} parent=5 // pred_fallthru
        _
      %p289 = scmp.lt.s32.totalorder %s19, 2
      // Predicated region
      $region45: #{tpu_custom_call.1} parent=5 // pred_check
        %p290 = pneg %p289
      $region46: #{tpu_custom_call.1} parent=5 // pred_check_branch
        %292 = sbr.rel (%p290) target = $region48
      $region47: #{tpu_custom_call.1} parent=5 // pred_region
        // Predicated region
        $region49: #{tpu_custom_call.1} parent=47 // pred_check
          %p293 = pneg %p39
        $region50: #{tpu_custom_call.1} parent=47 // pred_check_branch
          %295 = sbr.rel (%p293) target = $region52
        $region51: #{tpu_custom_call.1} parent=47 // pred_region
          %s296 = smul.u32 4, %s19
          %p297 = scmp.lt.s32.totalorder %s296, 7
          %s298 = scalar_select %p297, %s296, 7
          %s299 = smul.addr %s298, 8
          %s300 = scalar_lea.vmem %s0, %s299
          %s301 = smul.u32 4, %s19
        $region52: #{tpu_custom_call.1} parent=47 // pred_fallthru
          _
      $region48: #{tpu_custom_call.1} parent=5 // pred_fallthru
        _
      %p302 = scmp.le.s32.totalorder 1, %s19
      %p303 = scmp.lt.s32.totalorder %s19, 3
      %p304 = pnand %p302, %p303
      %p305 = pneg %p304
      // Predicated region
      $region53: #{tpu_custom_call.1} parent=5 // pred_check
        _
      $region54: #{tpu_custom_call.1} parent=5 // pred_check_branch
        %307 = sbr.rel (%p304) target = $region56
      $region55: #{tpu_custom_call.1} parent=5 // pred_region
        %s308 = ssub.s32 %s19, 1
        // Predicated region
        $region57: #{tpu_custom_call.1} parent=55 // pred_check
          %p309 = pneg %p192
        $region58: #{tpu_custom_call.1} parent=55 // pred_check_branch
          %311 = sbr.rel (%p309) target = $region60
        $region59: #{tpu_custom_call.1} parent=55 // pred_region
          %313 = dma.done [#allocation3], 4096
        $region60: #{tpu_custom_call.1} parent=55 // pred_fallthru
          _
        %s314 = smul.u32 4, %s24
        %p315 = scmp.lt.s32.totalorder %s314, 7
        %s316 = scalar_select %p315, %s314, 7
        %s317 = smul.addr %s316, 8
        %s318 = scalar_lea.vmem %s0, %s317
        %p319 = pneg %p45
        %p320 = pneg %p42
        %p321 = pneg %p66
        %p322 = pneg %p63
        %p323 = pneg %p87
        %p324 = pneg %p84
        %p325 = pneg %p108
        %p326 = pneg %p105
        %p327 = pneg %p129
        %p328 = pneg %p126
        %p329 = pneg %p150
        %p330 = pneg %p147
        %p331 = pneg %p171
        %p332 = pneg %p168
        %p333 = pneg %p192
        %p334 = pneg %p189
        %p335 = pneg %p213
        %p336 = pneg %p210
        %p337 = pneg %p239
        %p338 = pneg %p236
        %s339 = sand.u32 %s226, 1
        %s340 = scalar_lea.sflag [#allocation4], %s339
        %s341 = sand.u32 %s226, 1
        %s342 = smul.addr %s341, 64
        %s343 = scalar_lea.vmem [#allocation5], %s342
        %s344 = smul.u32 4, %s24
        %p345 = scmp.lt.s32.totalorder %s344, 7
        %s346 = scalar_select %p345, %s344, 7
        %s347 = smul.addr %s346, 8
        %s348 = scalar_lea.vmem %s0, %s347
        %s349 = smul.u32 4, %s24
        %v350 = vld [vmem:[%s348] sm:$0xff]
        %v351 = vld [vmem:[%s348 + $0x8] sm:$0xff]
        %v352 = vld [vmem:[%s348 + $0x10] sm:$0xff]
        %v353 = vld [vmem:[%s348 + $0x18] sm:$0xff]
        %vm354 = vcmask 80896
        %v355 = vsel %vm354, %v350, 0.0
        %356 = vadd.xlane.f32.xlu0 %v355
        %v357 = vpop.xlane.xlu0 %356
        %v358 = vsel %vm354, %v351, 0.0
        %359 = vadd.xlane.f32.xlu0 %v358
        %v360 = vpop.xlane.xlu0 %359
        %v361 = vsel %vm354, %v352, 0.0
        %362 = vadd.xlane.f32.xlu0 %v361
        %v363 = vpop.xlane.xlu0 %362
        %v364 = vsel %vm354, %v353, 0.0
        %365 = vadd.xlane.f32.xlu0 %v364
        %v366 = vpop.xlane.xlu0 %365
        %v367 = vrcp.pop 10.0
        %v368 = vmul.f32 10.0, %v367
        %v369 = vsub.f32 1.0, %v368
        %v370 = vmul.f32 %v367, %v369
        %v371 = vadd.f32 %v367, %v370
        %vm372 = vweird.f32 %v367
        %v373 = vsel %vm372, %v367, %v371
        %v374 = vmul.f32 %v357, %v373
        %v375 = vmul.f32 %v360, %v373
        %v376 = vmul.f32 %v363, %v373
        %v377 = vmul.f32 %v366, %v373
        %v378 = vsub.f32 %v350, %v374
        %v379 = vsub.f32 %v351, %v375
        %v380 = vsub.f32 %v352, %v376
        %v381 = vsub.f32 %v353, %v377
        %v382 = vmul.f32 %v378, %v378
        %v383 = vmul.f32 %v379, %v379
        %v384 = vmul.f32 %v380, %v380
        %v385 = vmul.f32 %v381, %v381
        %v386 = vsel %vm354, %v382, 0.0
        %387 = vadd.xlane.f32.xlu0 %v386
        %v388 = vpop.xlane.xlu0 %387
        %v389 = vsel %vm354, %v383, 0.0
        %390 = vadd.xlane.f32.xlu0 %v389
        %v391 = vpop.xlane.xlu0 %390
        %v392 = vsel %vm354, %v384, 0.0
        %393 = vadd.xlane.f32.xlu0 %v392
        %v394 = vpop.xlane.xlu0 %393
        %v395 = vsel %vm354, %v385, 0.0
        %396 = vadd.xlane.f32.xlu0 %v395
        %v397 = vpop.xlane.xlu0 %396
        %v398 = vmul.f32 %v388, 0.11111111
        %v399 = vmul.f32 %v391, 0.11111111
        %v400 = vmul.f32 %v394, 0.11111111
        %v401 = vmul.f32 %v397, 0.11111111
        %v402 = vrsqrt.pop %v398
        %v403 = vmul.f32 %v402, %v398
        %v404 = vmul.f32 %v403, %v402
        %v405 = vmul.f32 0.5, %v404
        %v406 = vsub.f32 1.5, %v405
        %v407 = vmul.f32 %v402, %v406
        %v408 = vmul.f32 %v398, %v407
        %vm409 = vcmp.eq.f32.partialorder %v398, inf
        %v410 = vsel %vm409, %v398, %v408
        %vm411 = vcmp.eq.f32.partialorder %v398, 0.0
        %v412 = vand.u32 %v398, 2147483648
        %v413 = vsel %vm411, %v412, %v410
        %v414 = vrsqrt.pop %v399
        %v415 = vmul.f32 %v414, %v399
        %v416 = vmul.f32 %v415, %v414
        %v417 = vmul.f32 0.5, %v416
        %v418 = vsub.f32 1.5, %v417
        %v419 = vmul.f32 %v414, %v418
        %v420 = vmul.f32 %v399, %v419
        %vm421 = vcmp.eq.f32.partialorder %v399, inf
        %v422 = vsel %vm421, %v399, %v420
        %vm423 = vcmp.eq.f32.partialorder %v399, 0.0
        %v424 = vand.u32 %v399, 2147483648
        %v425 = vsel %vm423, %v424, %v422
        %v426 = vrsqrt.pop %v400
        %v427 = vmul.f32 %v426, %v400
        %v428 = vmul.f32 %v427, %v426
        %v429 = vmul.f32 0.5, %v428
        %v430 = vsub.f32 1.5, %v429
        %v431 = vmul.f32 %v426, %v430
        %v432 = vmul.f32 %v400, %v431
        %vm433 = vcmp.eq.f32.partialorder %v400, inf
        %v434 = vsel %vm433, %v400, %v432
        %vm435 = vcmp.eq.f32.partialorder %v400, 0.0
        %v436 = vand.u32 %v400, 2147483648
        %v437 = vsel %vm435, %v436, %v434
        %v438 = vrsqrt.pop %v401
        %v439 = vmul.f32 %v438, %v401
        %v440 = vmul.f32 %v439, %v438
        %v441 = vmul.f32 0.5, %v440
        %v442 = vsub.f32 1.5, %v441
        %v443 = vmul.f32 %v438, %v442
        %v444 = vmul.f32 %v401, %v443
        %vm445 = vcmp.eq.f32.partialorder %v401, inf
        %v446 = vsel %vm445, %v401, %v444
        %vm447 = vcmp.eq.f32.partialorder %v401, 0.0
        %v448 = vand.u32 %v401, 2147483648
        %v449 = vsel %vm447, %v448, %v446
        %v450 = vadd.f32 %v413, 1e-06
        %v451 = vadd.f32 %v425, 1e-06
        %v452 = vadd.f32 %v437, 1e-06
        %v453 = vadd.f32 %v449, 1e-06
        %v454 = vrcp.pop %v450
        %v455 = vmul.f32 %v450, %v454
        %v456 = vsub.f32 1.0, %v455
        %v457 = vmul.f32 %v454, %v456
        %v458 = vadd.f32 %v454, %v457
        %vm459 = vweird.f32 %v450
        %vm460 = vweird.f32 %v454
        %vm461 = vmor %vm459, %vm460
        %v462 = vsel %vm461, %v454, %v458
        %v463 = vand.u32 2147483647, %v450
        %vm464 = vcmp.eq.f32.partialorder %v463, 8.507059e+37
        %v465 = vand.u32 %v450, 2147483648
        %v466 = vor.u32 1.1754944e-38, %v465
        %v467 = vsel %vm464, %v466, %v462
        %v468 = vmul.f32 1.0, %v467
        %v469 = vrcp.pop %v451
        %v470 = vmul.f32 %v451, %v469
        %v471 = vsub.f32 1.0, %v470
        %v472 = vmul.f32 %v469, %v471
        %v473 = vadd.f32 %v469, %v472
        %vm474 = vweird.f32 %v451
        %vm475 = vweird.f32 %v469
        %vm476 = vmor %vm474, %vm475
        %v477 = vsel %vm476, %v469, %v473
        %v478 = vand.u32 2147483647, %v451
        %vm479 = vcmp.eq.f32.partialorder %v478, 8.507059e+37
        %v480 = vand.u32 %v451, 2147483648
        %v481 = vor.u32 1.1754944e-38, %v480
        %v482 = vsel %vm479, %v481, %v477
        %v483 = vmul.f32 1.0, %v482
        %v484 = vrcp.pop %v452
        %v485 = vmul.f32 %v452, %v484
        %v486 = vsub.f32 1.0, %v485
        %v487 = vmul.f32 %v484, %v486
        %v488 = vadd.f32 %v484, %v487
        %vm489 = vweird.f32 %v452
        %vm490 = vweird.f32 %v484
        %vm491 = vmor %vm489, %vm490
        %v492 = vsel %vm491, %v484, %v488
        %v493 = vand.u32 2147483647, %v452
        %vm494 = vcmp.eq.f32.partialorder %v493, 8.507059e+37
        %v495 = vand.u32 %v452, 2147483648
        %v496 = vor.u32 1.1754944e-38, %v495
        %v497 = vsel %vm494, %v496, %v492
        %v498 = vmul.f32 1.0, %v497
        %v499 = vrcp.pop %v453
        %v500 = vmul.f32 %v453, %v499
        %v501 = vsub.f32 1.0, %v500
        %v502 = vmul.f32 %v499, %v501
        %v503 = vadd.f32 %v499, %v502
        %vm504 = vweird.f32 %v453
        %vm505 = vweird.f32 %v499
        %vm506 = vmor %vm504, %vm505
        %v507 = vsel %vm506, %v499, %v503
        %v508 = vand.u32 2147483647, %v453
        %vm509 = vcmp.eq.f32.partialorder %v508, 8.507059e+37
        %v510 = vand.u32 %v453, 2147483648
        %v511 = vor.u32 1.1754944e-38, %v510
        %v512 = vsel %vm509, %v511, %v507
        %v513 = vmul.f32 1.0, %v512
        %v514 = vmul.f32 %v378, %v468
        %v515 = vmul.f32 %v379, %v483
        %v516 = vmul.f32 %v380, %v498
        %v517 = vmul.f32 %v381, %v513
        %v518 = vld [vmem:[%s1] sm:$0xff]
        %v519 = vld [vmem:[%s1 + $0x8] sm:$0x3]
        %v520 = vld [vmem:[%s2] sm:$0x1]
        %v522 = vperm.slane %v520, 0
        %v525 = vsel %vm354, %v514, 0
        %v528 = vsel %vm354, %v515, 0
        %v531 = vsel %vm354, %v516, 0
        %v534 = vsel %vm354, %v517, 0
        %vm536 = vcmask 1041408
        %v538 = vsel %vm536, %v519, 0
        %540 = vmatpush.msra.mxu0 0.0
        %541 = vmatpush.msra.mxu0 0.0
        %542 = vmatpush.msra.mxu0 0.0
        %543 = vmatpush.msra.mxu0 0.0
        %544 = vmatpush.msra.mxu0 0.0
        %545 = vmatpush.msra.mxu0 0.0
        %546 = vmatpush.msra.mxu0 0.0
        %547 = vmatpush.msra.mxu0 0.0
        %548 = vmatpush.msra.mxu0 0.0
        %549 = vmatpush.msra.mxu0 0.0
        %550 = vmatpush.msra.mxu0 0.0
        %551 = vmatpush.msra.mxu0 0.0
        %552 = vmatpush.msra.mxu0 0.0
        %553 = vmatpush.msra.mxu0 0.0
        %554 = vmatpush.msra.mxu0 %v538
        %555 = vmatpush.msra.mxu0 %v518
        %556 = vmatmul.f32.gmra.mxu0 %v525
        %v557 = vpop.f32.mrf.mxu0
        %v558 = vadd.f32 %v522, %v557
        %559 = vmatmul.f32.gmra.mxu0 %v528
        %v560 = vpop.f32.mrf.mxu0
        %v561 = vadd.f32 %v522, %v560
        %562 = vmatmul.f32.gmra.mxu0 %v531
        %v563 = vpop.f32.mrf.mxu0
        %v564 = vadd.f32 %v522, %v563
        %565 = vmatmul.f32.gmra.mxu0 %v534
        %v566 = vpop.f32.mrf.mxu0
        %v567 = vadd.f32 %v522, %v566
        %568 = vdwg.mxu0
        %vm569 = vcmp.gt.f32.partialorder %v558, 0.0
        %vm570 = vcmp.gt.f32.partialorder %v561, 0.0
        %vm571 = vcmp.gt.f32.partialorder %v564, 0.0
        %vm572 = vcmp.gt.f32.partialorder %v567, 0.0
        %v573 = vmul.f32 %v558, 1.442695
        %v574 = vpow.pop %v573
        %v575 = vmul.f32 %v561, 1.442695
        %v576 = vpow.pop %v575
        %v577 = vmul.f32 %v564, 1.442695
        %v578 = vpow.pop %v577
        %v579 = vmul.f32 %v567, 1.442695
        %v580 = vpow.pop %v579
        %v581 = vsub.f32 %v574, 1.0
        %v582 = vsub.f32 %v576, 1.0
        %v583 = vsub.f32 %v578, 1.0
        %v584 = vsub.f32 %v580, 1.0
        %v585 = vsel %vm569, %v558, %v581
        %v586 = vsel %vm570, %v561, %v582
        %v587 = vsel %vm571, %v564, %v583
        %v588 = vsel %vm572, %v567, %v584
        %589 = vadd.xlane.f32.xlu0 %v585
        %v590 = vpop.xlane.xlu0 %589
        %591 = vadd.xlane.f32.xlu0 %v586
        %v592 = vpop.xlane.xlu0 %591
        %593 = vadd.xlane.f32.xlu0 %v587
        %v594 = vpop.xlane.xlu0 %593
        %595 = vadd.xlane.f32.xlu0 %v588
        %v596 = vpop.xlane.xlu0 %595
        %v597 = vrcp.pop 128.0
        %v598 = vmul.f32 128.0, %v597
        %v599 = vsub.f32 1.0, %v598
        %v600 = vmul.f32 %v597, %v599
        %v601 = vadd.f32 %v597, %v600
        %vm602 = vweird.f32 %v597
        %v603 = vsel %vm602, %v597, %v601
        %v604 = vmul.f32 %v590, %v603
        %v605 = vmul.f32 %v592, %v603
        %v606 = vmul.f32 %v594, %v603
        %v607 = vmul.f32 %v596, %v603
        %v608 = vsub.f32 %v585, %v604
        %v609 = vsub.f32 %v586, %v605
        %v610 = vsub.f32 %v587, %v606
        %v611 = vsub.f32 %v588, %v607
        %v612 = vmul.f32 %v608, %v608
        %v613 = vmul.f32 %v609, %v609
        %v614 = vmul.f32 %v610, %v610
        %v615 = vmul.f32 %v611, %v611
        %616 = vadd.xlane.f32.xlu0 %v612
        %v617 = vpop.xlane.xlu0 %616
        %618 = vadd.xlane.f32.xlu0 %v613
        %v619 = vpop.xlane.xlu0 %618
        %620 = vadd.xlane.f32.xlu0 %v614
        %v621 = vpop.xlane.xlu0 %620
        %622 = vadd.xlane.f32.xlu0 %v615
        %v623 = vpop.xlane.xlu0 %622
        %v624 = vmul.f32 %v617, 0.007874016
        %v625 = vmul.f32 %v619, 0.007874016
        %v626 = vmul.f32 %v621, 0.007874016
        %v627 = vmul.f32 %v623, 0.007874016
        %v628 = vrsqrt.pop %v624
        %v629 = vmul.f32 %v628, %v624
        %v630 = vmul.f32 %v629, %v628
        %v631 = vmul.f32 0.5, %v630
        %v632 = vsub.f32 1.5, %v631
        %v633 = vmul.f32 %v628, %v632
        %v634 = vmul.f32 %v624, %v633
        %vm635 = vcmp.eq.f32.partialorder %v624, inf
        %v636 = vsel %vm635, %v624, %v634
        %vm637 = vcmp.eq.f32.partialorder %v624, 0.0
        %v638 = vand.u32 %v624, 2147483648
        %v639 = vsel %vm637, %v638, %v636
        %v640 = vrsqrt.pop %v625
        %v641 = vmul.f32 %v640, %v625
        %v642 = vmul.f32 %v641, %v640
        %v643 = vmul.f32 0.5, %v642
        %v644 = vsub.f32 1.5, %v643
        %v645 = vmul.f32 %v640, %v644
        %v646 = vmul.f32 %v625, %v645
        %vm647 = vcmp.eq.f32.partialorder %v625, inf
        %v648 = vsel %vm647, %v625, %v646
        %vm649 = vcmp.eq.f32.partialorder %v625, 0.0
        %v650 = vand.u32 %v625, 2147483648
        %v651 = vsel %vm649, %v650, %v648
        %v652 = vrsqrt.pop %v626
        %v653 = vmul.f32 %v652, %v626
        %v654 = vmul.f32 %v653, %v652
        %v655 = vmul.f32 0.5, %v654
        %v656 = vsub.f32 1.5, %v655
        %v657 = vmul.f32 %v652, %v656
        %v658 = vmul.f32 %v626, %v657
        %vm659 = vcmp.eq.f32.partialorder %v626, inf
        %v660 = vsel %vm659, %v626, %v658
        %vm661 = vcmp.eq.f32.partialorder %v626, 0.0
        %v662 = vand.u32 %v626, 2147483648
        %v663 = vsel %vm661, %v662, %v660
        %v664 = vrsqrt.pop %v627
        %v665 = vmul.f32 %v664, %v627
        %v666 = vmul.f32 %v665, %v664
        %v667 = vmul.f32 0.5, %v666
        %v668 = vsub.f32 1.5, %v667
        %v669 = vmul.f32 %v664, %v668
        %v670 = vmul.f32 %v627, %v669
        %vm671 = vcmp.eq.f32.partialorder %v627, inf
        %v672 = vsel %vm671, %v627, %v670
        %vm673 = vcmp.eq.f32.partialorder %v627, 0.0
        %v674 = vand.u32 %v627, 2147483648
        %v675 = vsel %vm673, %v674, %v672
        %v676 = vadd.f32 %v639, 1e-06
        %v677 = vadd.f32 %v651, 1e-06
        %v678 = vadd.f32 %v663, 1e-06
        %v679 = vadd.f32 %v675, 1e-06
        %v680 = vrcp.pop %v676
        %v681 = vmul.f32 %v676, %v680
        %v682 = vsub.f32 1.0, %v681
        %v683 = vmul.f32 %v680, %v682
        %v684 = vadd.f32 %v680, %v683
        %vm685 = vweird.f32 %v676
        %vm686 = vweird.f32 %v680
        %vm687 = vmor %vm685, %vm686
        %v688 = vsel %vm687, %v680, %v684
        %v689 = vand.u32 2147483647, %v676
        %vm690 = vcmp.eq.f32.partialorder %v689, 8.507059e+37
        %v691 = vand.u32 %v676, 2147483648
        %v692 = vor.u32 1.1754944e-38, %v691
        %v693 = vsel %vm690, %v692, %v688
        %v694 = vmul.f32 1.0, %v693
        %v695 = vrcp.pop %v677
        %v696 = vmul.f32 %v677, %v695
        %v697 = vsub.f32 1.0, %v696
        %v698 = vmul.f32 %v695, %v697
        %v699 = vadd.f32 %v695, %v698
        %vm700 = vweird.f32 %v677
        %vm701 = vweird.f32 %v695
        %vm702 = vmor %vm700, %vm701
        %v703 = vsel %vm702, %v695, %v699
        %v704 = vand.u32 2147483647, %v677
        %vm705 = vcmp.eq.f32.partialorder %v704, 8.507059e+37
        %v706 = vand.u32 %v677, 2147483648
        %v707 = vor.u32 1.1754944e-38, %v706
        %v708 = vsel %vm705, %v707, %v703
        %v709 = vmul.f32 1.0, %v708
        %v710 = vrcp.pop %v678
        %v711 = vmul.f32 %v678, %v710
        %v712 = vsub.f32 1.0, %v711
        %v713 = vmul.f32 %v710, %v712
        %v714 = vadd.f32 %v710, %v713
        %vm715 = vweird.f32 %v678
        %vm716 = vweird.f32 %v710
        %vm717 = vmor %vm715, %vm716
        %v718 = vsel %vm717, %v710, %v714
        %v719 = vand.u32 2147483647, %v678
        %vm720 = vcmp.eq.f32.partialorder %v719, 8.507059e+37
        %v721 = vand.u32 %v678, 2147483648
        %v722 = vor.u32 1.1754944e-38, %v721
        %v723 = vsel %vm720, %v722, %v718
        %v724 = vmul.f32 1.0, %v723
        %v725 = vrcp.pop %v679
        %v726 = vmul.f32 %v679, %v725
        %v727 = vsub.f32 1.0, %v726
        %v728 = vmul.f32 %v725, %v727
        %v729 = vadd.f32 %v725, %v728
        %vm730 = vweird.f32 %v679
        %vm731 = vweird.f32 %v725
        %vm732 = vmor %vm730, %vm731
        %v733 = vsel %vm732, %v725, %v729
        %v734 = vand.u32 2147483647, %v679
        %vm735 = vcmp.eq.f32.partialorder %v734, 8.507059e+37
        %v736 = vand.u32 %v679, 2147483648
        %v737 = vor.u32 1.1754944e-38, %v736
        %v738 = vsel %vm735, %v737, %v733
        %v739 = vmul.f32 1.0, %v738
        %v740 = vmul.f32 %v608, %v694
        %v741 = vmul.f32 %v609, %v709
        %v742 = vmul.f32 %v610, %v724
        %v743 = vmul.f32 %v611, %v739
        %v744 = vld [vmem:[%s3] sm:$0xff]
        %v745 = vld [vmem:[%s3 + $0x8] sm:$0xff]
        %v746 = vld [vmem:[%s3 + $0x10] sm:$0xff]
        %v747 = vld [vmem:[%s3 + $0x18] sm:$0xff]
        %v748 = vld [vmem:[%s3 + $0x20] sm:$0xff]
        %v749 = vld [vmem:[%s3 + $0x28] sm:$0xff]
        %v750 = vld [vmem:[%s3 + $0x30] sm:$0xff]
        %v751 = vld [vmem:[%s3 + $0x38] sm:$0xff]
        %v752 = vld [vmem:[%s3 + $0x40] sm:$0xff]
        %v753 = vld [vmem:[%s3 + $0x48] sm:$0xff]
        %v754 = vld [vmem:[%s3 + $0x50] sm:$0xff]
        %v755 = vld [vmem:[%s3 + $0x58] sm:$0xff]
        %v756 = vld [vmem:[%s3 + $0x60] sm:$0xff]
        %v757 = vld [vmem:[%s3 + $0x68] sm:$0xff]
        %v758 = vld [vmem:[%s3 + $0x70] sm:$0xff]
        %v759 = vld [vmem:[%s3 + $0x78] sm:$0xff]
        %v760 = vld [vmem:[%s4] sm:$0x1]
        %v762 = vperm.slane %v760, 0
        %764 = vmatpush.msra.mxu0 %v759
        %765 = vmatpush.msra.mxu0 %v758
        %766 = vmatpush.msra.mxu0 %v757
        %767 = vmatpush.msra.mxu0 %v756
        %768 = vmatpush.msra.mxu0 %v755
        %769 = vmatpush.msra.mxu0 %v754
        %770 = vmatpush.msra.mxu0 %v753
        %771 = vmatpush.msra.mxu0 %v752
        %772 = vmatpush.msra.mxu0 %v751
        %773 = vmatpush.msra.mxu0 %v750
        %774 = vmatpush.msra.mxu0 %v749
        %775 = vmatpush.msra.mxu0 %v748
        %776 = vmatpush.msra.mxu0 %v747
        %777 = vmatpush.msra.mxu0 %v746
        %778 = vmatpush.msra.mxu0 %v745
        %779 = vmatpush.msra.mxu0 %v744
        %780 = vmatmul.f32.gmra.mxu0 %v740
        %v781 = vpop.f32.mrf.mxu0
        %v782 = vadd.f32 %v762, %v781
        %783 = vmatmul.f32.gmra.mxu0 %v741
        %v784 = vpop.f32.mrf.mxu0
        %v785 = vadd.f32 %v762, %v784
        %786 = vmatmul.f32.gmra.mxu0 %v742
        %v787 = vpop.f32.mrf.mxu0
        %v788 = vadd.f32 %v762, %v787
        %789 = vmatmul.f32.gmra.mxu0 %v743
        %v790 = vpop.f32.mrf.mxu0
        %v791 = vadd.f32 %v762, %v790
        %792 = vdwg.mxu0
        %vm793 = vcmp.gt.f32.partialorder %v782, 0.0
        %vm794 = vcmp.gt.f32.partialorder %v785, 0.0
        %vm795 = vcmp.gt.f32.partialorder %v788, 0.0
        %vm796 = vcmp.gt.f32.partialorder %v791, 0.0
        %v797 = vmul.f32 %v782, 1.442695
        %v798 = vpow.pop %v797
        %v799 = vmul.f32 %v785, 1.442695
        %v800 = vpow.pop %v799
        %v801 = vmul.f32 %v788, 1.442695
        %v802 = vpow.pop %v801
        %v803 = vmul.f32 %v791, 1.442695
        %v804 = vpow.pop %v803
        %v805 = vsub.f32 %v798, 1.0
        %v806 = vsub.f32 %v800, 1.0
        %v807 = vsub.f32 %v802, 1.0
        %v808 = vsub.f32 %v804, 1.0
        %v809 = vsel %vm793, %v782, %v805
        %v810 = vsel %vm794, %v785, %v806
        %v811 = vsel %vm795, %v788, %v807
        %v812 = vsel %vm796, %v791, %v808
        %vm813 = vcmask 523264
        %v814 = vsel %vm813, %v809, 0.0
        %815 = vadd.xlane.f32.xlu0 %v814
        %v816 = vpop.xlane.xlu0 %815
        %v817 = vsel %vm813, %v810, 0.0
        %818 = vadd.xlane.f32.xlu0 %v817
        %v819 = vpop.xlane.xlu0 %818
        %v820 = vsel %vm813, %v811, 0.0
        %821 = vadd.xlane.f32.xlu0 %v820
        %v822 = vpop.xlane.xlu0 %821
        %v823 = vsel %vm813, %v812, 0.0
        %824 = vadd.xlane.f32.xlu0 %v823
        %v825 = vpop.xlane.xlu0 %824
        %v826 = vrcp.pop 64.0
        %v827 = vmul.f32 64.0, %v826
        %v828 = vsub.f32 1.0, %v827
        %v829 = vmul.f32 %v826, %v828
        %v830 = vadd.f32 %v826, %v829
        %vm831 = vweird.f32 %v826
        %v832 = vsel %vm831, %v826, %v830
        %v833 = vmul.f32 %v816, %v832
        %v834 = vmul.f32 %v819, %v832
        %v835 = vmul.f32 %v822, %v832
        %v836 = vmul.f32 %v825, %v832
        %v837 = vsub.f32 %v809, %v833
        %v838 = vsub.f32 %v810, %v834
        %v839 = vsub.f32 %v811, %v835
        %v840 = vsub.f32 %v812, %v836
        %v841 = vmul.f32 %v837, %v837
        %v842 = vmul.f32 %v838, %v838
        %v843 = vmul.f32 %v839, %v839
        %v844 = vmul.f32 %v840, %v840
        %v845 = vsel %vm813, %v841, 0.0
        %846 = vadd.xlane.f32.xlu0 %v845
        %v847 = vpop.xlane.xlu0 %846
        %v848 = vsel %vm813, %v842, 0.0
        %849 = vadd.xlane.f32.xlu0 %v848
        %v850 = vpop.xlane.xlu0 %849
        %v851 = vsel %vm813, %v843, 0.0
        %852 = vadd.xlane.f32.xlu0 %v851
        %v853 = vpop.xlane.xlu0 %852
        %v854 = vsel %vm813, %v844, 0.0
        %855 = vadd.xlane.f32.xlu0 %v854
        %v856 = vpop.xlane.xlu0 %855
        %v857 = vmul.f32 %v847, 0.015873017
        %v858 = vmul.f32 %v850, 0.015873017
        %v859 = vmul.f32 %v853, 0.015873017
        %v860 = vmul.f32 %v856, 0.015873017
        %v861 = vrsqrt.pop %v857
        %v862 = vmul.f32 %v861, %v857
        %v863 = vmul.f32 %v862, %v861
        %v864 = vmul.f32 0.5, %v863
        %v865 = vsub.f32 1.5, %v864
        %v866 = vmul.f32 %v861, %v865
        %v867 = vmul.f32 %v857, %v866
        %vm868 = vcmp.eq.f32.partialorder %v857, inf
        %v869 = vsel %vm868, %v857, %v867
        %vm870 = vcmp.eq.f32.partialorder %v857, 0.0
        %v871 = vand.u32 %v857, 2147483648
        %v872 = vsel %vm870, %v871, %v869
        %v873 = vrsqrt.pop %v858
        %v874 = vmul.f32 %v873, %v858
        %v875 = vmul.f32 %v874, %v873
        %v876 = vmul.f32 0.5, %v875
        %v877 = vsub.f32 1.5, %v876
        %v878 = vmul.f32 %v873, %v877
        %v879 = vmul.f32 %v858, %v878
        %vm880 = vcmp.eq.f32.partialorder %v858, inf
        %v881 = vsel %vm880, %v858, %v879
        %vm882 = vcmp.eq.f32.partialorder %v858, 0.0
        %v883 = vand.u32 %v858, 2147483648
        %v884 = vsel %vm882, %v883, %v881
        %v885 = vrsqrt.pop %v859
        %v886 = vmul.f32 %v885, %v859
        %v887 = vmul.f32 %v886, %v885
        %v888 = vmul.f32 0.5, %v887
        %v889 = vsub.f32 1.5, %v888
        %v890 = vmul.f32 %v885, %v889
        %v891 = vmul.f32 %v859, %v890
        %vm892 = vcmp.eq.f32.partialorder %v859, inf
        %v893 = vsel %vm892, %v859, %v891
        %vm894 = vcmp.eq.f32.partialorder %v859, 0.0
        %v895 = vand.u32 %v859, 2147483648
        %v896 = vsel %vm894, %v895, %v893
        %v897 = vrsqrt.pop %v860
        %v898 = vmul.f32 %v897, %v860
        %v899 = vmul.f32 %v898, %v897
        %v900 = vmul.f32 0.5, %v899
        %v901 = vsub.f32 1.5, %v900
        %v902 = vmul.f32 %v897, %v901
        %v903 = vmul.f32 %v860, %v902
        %vm904 = vcmp.eq.f32.partialorder %v860, inf
        %v905 = vsel %vm904, %v860, %v903
        %vm906 = vcmp.eq.f32.partialorder %v860, 0.0
        %v907 = vand.u32 %v860, 2147483648
        %v908 = vsel %vm906, %v907, %v905
        %v909 = vadd.f32 %v872, 1e-06
        %v910 = vadd.f32 %v884, 1e-06
        %v911 = vadd.f32 %v896, 1e-06
        %v912 = vadd.f32 %v908, 1e-06
        %v913 = vrcp.pop %v909
        %v914 = vmul.f32 %v909, %v913
        %v915 = vsub.f32 1.0, %v914
        %v916 = vmul.f32 %v913, %v915
        %v917 = vadd.f32 %v913, %v916
        %vm918 = vweird.f32 %v909
        %vm919 = vweird.f32 %v913
        %vm920 = vmor %vm918, %vm919
        %v921 = vsel %vm920, %v913, %v917
        %v922 = vand.u32 2147483647, %v909
        %vm923 = vcmp.eq.f32.partialorder %v922, 8.507059e+37
        %v924 = vand.u32 %v909, 2147483648
        %v925 = vor.u32 1.1754944e-38, %v924
        %v926 = vsel %vm923, %v925, %v921
        %v927 = vmul.f32 1.0, %v926
        %v928 = vrcp.pop %v910
        %v929 = vmul.f32 %v910, %v928
        %v930 = vsub.f32 1.0, %v929
        %v931 = vmul.f32 %v928, %v930
        %v932 = vadd.f32 %v928, %v931
        %vm933 = vweird.f32 %v910
        %vm934 = vweird.f32 %v928
        %vm935 = vmor %vm933, %vm934
        %v936 = vsel %vm935, %v928, %v932
        %v937 = vand.u32 2147483647, %v910
        %vm938 = vcmp.eq.f32.partialorder %v937, 8.507059e+37
        %v939 = vand.u32 %v910, 2147483648
        %v940 = vor.u32 1.1754944e-38, %v939
        %v941 = vsel %vm938, %v940, %v936
        %v942 = vmul.f32 1.0, %v941
        %v943 = vrcp.pop %v911
        %v944 = vmul.f32 %v911, %v943
        %v945 = vsub.f32 1.0, %v944
        %v946 = vmul.f32 %v943, %v945
        %v947 = vadd.f32 %v943, %v946
        %vm948 = vweird.f32 %v911
        %vm949 = vweird.f32 %v943
        %vm950 = vmor %vm948, %vm949
        %v951 = vsel %vm950, %v943, %v947
        %v952 = vand.u32 2147483647, %v911
        %vm953 = vcmp.eq.f32.partialorder %v952, 8.507059e+37
        %v954 = vand.u32 %v911, 2147483648
        %v955 = vor.u32 1.1754944e-38, %v954
        %v956 = vsel %vm953, %v955, %v951
        %v957 = vmul.f32 1.0, %v956
        %v958 = vrcp.pop %v912
        %v959 = vmul.f32 %v912, %v958
        %v960 = vsub.f32 1.0, %v959
        %v961 = vmul.f32 %v958, %v960
        %v962 = vadd.f32 %v958, %v961
        %vm963 = vweird.f32 %v912
        %vm964 = vweird.f32 %v958
        %vm965 = vmor %vm963, %vm964
        %v966 = vsel %vm965, %v958, %v962
        %v967 = vand.u32 2147483647, %v912
        %vm968 = vcmp.eq.f32.partialorder %v967, 8.507059e+37
        %v969 = vand.u32 %v912, 2147483648
        %v970 = vor.u32 1.1754944e-38, %v969
        %v971 = vsel %vm968, %v970, %v966
        %v972 = vmul.f32 1.0, %v971
        %v973 = vmul.f32 %v837, %v927
        %v974 = vmul.f32 %v838, %v942
        %v975 = vmul.f32 %v839, %v957
        %v976 = vmul.f32 %v840, %v972
        %v977 = vld [vmem:[%s5] sm:$0xff]
        %v978 = vld [vmem:[%s5 + $0x8] sm:$0xff]
        %v979 = vld [vmem:[%s5 + $0x10] sm:$0xff]
        %v980 = vld [vmem:[%s5 + $0x18] sm:$0xff]
        %v981 = vld [vmem:[%s5 + $0x20] sm:$0xff]
        %v982 = vld [vmem:[%s5 + $0x28] sm:$0xff]
        %v983 = vld [vmem:[%s5 + $0x30] sm:$0xff]
        %v984 = vld [vmem:[%s5 + $0x38] sm:$0xff]
        %v985 = vld [vmem:[%s6] sm:$0x1]
        %v987 = vperm.slane %v985, 0
        %v990 = vsel %vm813, %v973, 0
        %v993 = vsel %vm813, %v974, 0
        %v996 = vsel %vm813, %v975, 0
        %v999 = vsel %vm813, %v976, 0
        %1001 = vmatpush.msra.mxu0 0.0
        %1002 = vmatpush.msra.mxu0 0.0
        %1003 = vmatpush.msra.mxu0 0.0
        %1004 = vmatpush.msra.mxu0 0.0
        %1005 = vmatpush.msra.mxu0 0.0
        %1006 = vmatpush.msra.mxu0 0.0
        %1007 = vmatpush.msra.mxu0 0.0
        %1008 = vmatpush.msra.mxu0 0.0
        %1009 = vmatpush.msra.mxu0 %v984
        %1010 = vmatpush.msra.mxu0 %v983
        %1011 = vmatpush.msra.mxu0 %v982
        %1012 = vmatpush.msra.mxu0 %v981
        %1013 = vmatpush.msra.mxu0 %v980
        %1014 = vmatpush.msra.mxu0 %v979
        %1015 = vmatpush.msra.mxu0 %v978
        %1016 = vmatpush.msra.mxu0 %v977
        %1017 = vmatmul.f32.gmra.mxu0 %v990
        %v1018 = vpop.f32.mrf.mxu0
        %v1019 = vadd.f32 %v987, %v1018
        %1020 = vmatmul.f32.gmra.mxu0 %v993
        %v1021 = vpop.f32.mrf.mxu0
        %v1022 = vadd.f32 %v987, %v1021
        %1023 = vmatmul.f32.gmra.mxu0 %v996
        %v1024 = vpop.f32.mrf.mxu0
        %v1025 = vadd.f32 %v987, %v1024
        %1026 = vmatmul.f32.gmra.mxu0 %v999
        %v1027 = vpop.f32.mrf.mxu0
        %v1028 = vadd.f32 %v987, %v1027
        %1029 = vdwg.mxu0
        %vm1030 = vcmp.gt.f32.partialorder %v1019, 0.0
        %vm1031 = vcmp.gt.f32.partialorder %v1022, 0.0
        %vm1032 = vcmp.gt.f32.partialorder %v1025, 0.0
        %vm1033 = vcmp.gt.f32.partialorder %v1028, 0.0
        %v1034 = vmul.f32 %v1019, 1.442695
        %v1035 = vpow.pop %v1034
        %v1036 = vmul.f32 %v1022, 1.442695
        %v1037 = vpow.pop %v1036
        %v1038 = vmul.f32 %v1025, 1.442695
        %v1039 = vpow.pop %v1038
        %v1040 = vmul.f32 %v1028, 1.442695
        %v1041 = vpow.pop %v1040
        %v1042 = vsub.f32 %v1035, 1.0
        %v1043 = vsub.f32 %v1037, 1.0
        %v1044 = vsub.f32 %v1039, 1.0
        %v1045 = vsub.f32 %v1041, 1.0
        %v1046 = vsel %vm1030, %v1019, %v1042
        %v1047 = vsel %vm1031, %v1022, %v1043
        %v1048 = vsel %vm1032, %v1025, %v1044
        %v1049 = vsel %vm1033, %v1028, %v1045
        %vm1050 = vcmask 261120
        %v1051 = vsel %vm1050, %v1046, 0.0
        %1052 = vadd.xlane.f32.xlu0 %v1051
        %v1053 = vpop.xlane.xlu0 %1052
        %v1054 = vsel %vm1050, %v1047, 0.0
        %1055 = vadd.xlane.f32.xlu0 %v1054
        %v1056 = vpop.xlane.xlu0 %1055
        %v1057 = vsel %vm1050, %v1048, 0.0
        %1058 = vadd.xlane.f32.xlu0 %v1057
        %v1059 = vpop.xlane.xlu0 %1058
        %v1060 = vsel %vm1050, %v1049, 0.0
        %1061 = vadd.xlane.f32.xlu0 %v1060
        %v1062 = vpop.xlane.xlu0 %1061
        %v1063 = vrcp.pop 32.0
        %v1064 = vmul.f32 32.0, %v1063
        %v1065 = vsub.f32 1.0, %v1064
        %v1066 = vmul.f32 %v1063, %v1065
        %v1067 = vadd.f32 %v1063, %v1066
        %vm1068 = vweird.f32 %v1063
        %v1069 = vsel %vm1068, %v1063, %v1067
        %v1070 = vmul.f32 %v1053, %v1069
        %v1071 = vmul.f32 %v1056, %v1069
        %v1072 = vmul.f32 %v1059, %v1069
        %v1073 = vmul.f32 %v1062, %v1069
        %v1074 = vsub.f32 %v1046, %v1070
        %v1075 = vsub.f32 %v1047, %v1071
        %v1076 = vsub.f32 %v1048, %v1072
        %v1077 = vsub.f32 %v1049, %v1073
        %v1078 = vmul.f32 %v1074, %v1074
        %v1079 = vmul.f32 %v1075, %v1075
        %v1080 = vmul.f32 %v1076, %v1076
        %v1081 = vmul.f32 %v1077, %v1077
        %v1082 = vsel %vm1050, %v1078, 0.0
        %1083 = vadd.xlane.f32.xlu0 %v1082
        %v1084 = vpop.xlane.xlu0 %1083
        %v1085 = vsel %vm1050, %v1079, 0.0
        %1086 = vadd.xlane.f32.xlu0 %v1085
        %v1087 = vpop.xlane.xlu0 %1086
        %v1088 = vsel %vm1050, %v1080, 0.0
        %1089 = vadd.xlane.f32.xlu0 %v1088
        %v1090 = vpop.xlane.xlu0 %1089
        %v1091 = vsel %vm1050, %v1081, 0.0
        %1092 = vadd.xlane.f32.xlu0 %v1091
        %v1093 = vpop.xlane.xlu0 %1092
        %v1094 = vmul.f32 %v1084, 0.032258064
        %v1095 = vmul.f32 %v1087, 0.032258064
        %v1096 = vmul.f32 %v1090, 0.032258064
        %v1097 = vmul.f32 %v1093, 0.032258064
        %v1098 = vrsqrt.pop %v1094
        %v1099 = vmul.f32 %v1098, %v1094
        %v1100 = vmul.f32 %v1099, %v1098
        %v1101 = vmul.f32 0.5, %v1100
        %v1102 = vsub.f32 1.5, %v1101
        %v1103 = vmul.f32 %v1098, %v1102
        %v1104 = vmul.f32 %v1094, %v1103
        %vm1105 = vcmp.eq.f32.partialorder %v1094, inf
        %v1106 = vsel %vm1105, %v1094, %v1104
        %vm1107 = vcmp.eq.f32.partialorder %v1094, 0.0
        %v1108 = vand.u32 %v1094, 2147483648
        %v1109 = vsel %vm1107, %v1108, %v1106
        %v1110 = vrsqrt.pop %v1095
        %v1111 = vmul.f32 %v1110, %v1095
        %v1112 = vmul.f32 %v1111, %v1110
        %v1113 = vmul.f32 0.5, %v1112
        %v1114 = vsub.f32 1.5, %v1113
        %v1115 = vmul.f32 %v1110, %v1114
        %v1116 = vmul.f32 %v1095, %v1115
        %vm1117 = vcmp.eq.f32.partialorder %v1095, inf
        %v1118 = vsel %vm1117, %v1095, %v1116
        %vm1119 = vcmp.eq.f32.partialorder %v1095, 0.0
        %v1120 = vand.u32 %v1095, 2147483648
        %v1121 = vsel %vm1119, %v1120, %v1118
        %v1122 = vrsqrt.pop %v1096
        %v1123 = vmul.f32 %v1122, %v1096
        %v1124 = vmul.f32 %v1123, %v1122
        %v1125 = vmul.f32 0.5, %v1124
        %v1126 = vsub.f32 1.5, %v1125
        %v1127 = vmul.f32 %v1122, %v1126
        %v1128 = vmul.f32 %v1096, %v1127
        %vm1129 = vcmp.eq.f32.partialorder %v1096, inf
        %v1130 = vsel %vm1129, %v1096, %v1128
        %vm1131 = vcmp.eq.f32.partialorder %v1096, 0.0
        %v1132 = vand.u32 %v1096, 2147483648
        %v1133 = vsel %vm1131, %v1132, %v1130
        %v1134 = vrsqrt.pop %v1097
        %v1135 = vmul.f32 %v1134, %v1097
        %v1136 = vmul.f32 %v1135, %v1134
        %v1137 = vmul.f32 0.5, %v1136
        %v1138 = vsub.f32 1.5, %v1137
        %v1139 = vmul.f32 %v1134, %v1138
        %v1140 = vmul.f32 %v1097, %v1139
        %vm1141 = vcmp.eq.f32.partialorder %v1097, inf
        %v1142 = vsel %vm1141, %v1097, %v1140
        %vm1143 = vcmp.eq.f32.partialorder %v1097, 0.0
        %v1144 = vand.u32 %v1097, 2147483648
        %v1145 = vsel %vm1143, %v1144, %v1142
        %v1146 = vadd.f32 %v1109, 1e-06
        %v1147 = vadd.f32 %v1121, 1e-06
        %v1148 = vadd.f32 %v1133, 1e-06
        %v1149 = vadd.f32 %v1145, 1e-06
        %v1150 = vrcp.pop %v1146
        %v1151 = vmul.f32 %v1146, %v1150
        %v1152 = vsub.f32 1.0, %v1151
        %v1153 = vmul.f32 %v1150, %v1152
        %v1154 = vadd.f32 %v1150, %v1153
        %vm1155 = vweird.f32 %v1146
        %vm1156 = vweird.f32 %v1150
        %vm1157 = vmor %vm1155, %vm1156
        %v1158 = vsel %vm1157, %v1150, %v1154
        %v1159 = vand.u32 2147483647, %v1146
        %vm1160 = vcmp.eq.f32.partialorder %v1159, 8.507059e+37
        %v1161 = vand.u32 %v1146, 2147483648
        %v1162 = vor.u32 1.1754944e-38, %v1161
        %v1163 = vsel %vm1160, %v1162, %v1158
        %v1164 = vmul.f32 1.0, %v1163
        %v1165 = vrcp.pop %v1147
        %v1166 = vmul.f32 %v1147, %v1165
        %v1167 = vsub.f32 1.0, %v1166
        %v1168 = vmul.f32 %v1165, %v1167
        %v1169 = vadd.f32 %v1165, %v1168
        %vm1170 = vweird.f32 %v1147
        %vm1171 = vweird.f32 %v1165
        %vm1172 = vmor %vm1170, %vm1171
        %v1173 = vsel %vm1172, %v1165, %v1169
        %v1174 = vand.u32 2147483647, %v1147
        %vm1175 = vcmp.eq.f32.partialorder %v1174, 8.507059e+37
        %v1176 = vand.u32 %v1147, 2147483648
        %v1177 = vor.u32 1.1754944e-38, %v1176
        %v1178 = vsel %vm1175, %v1177, %v1173
        %v1179 = vmul.f32 1.0, %v1178
        %v1180 = vrcp.pop %v1148
        %v1181 = vmul.f32 %v1148, %v1180
        %v1182 = vsub.f32 1.0, %v1181
        %v1183 = vmul.f32 %v1180, %v1182
        %v1184 = vadd.f32 %v1180, %v1183
        %vm1185 = vweird.f32 %v1148
        %vm1186 = vweird.f32 %v1180
        %vm1187 = vmor %vm1185, %vm1186
        %v1188 = vsel %vm1187, %v1180, %v1184
        %v1189 = vand.u32 2147483647, %v1148
        %vm1190 = vcmp.eq.f32.partialorder %v1189, 8.507059e+37
        %v1191 = vand.u32 %v1148, 2147483648
        %v1192 = vor.u32 1.1754944e-38, %v1191
        %v1193 = vsel %vm1190, %v1192, %v1188
        %v1194 = vmul.f32 1.0, %v1193
        %v1195 = vrcp.pop %v1149
        %v1196 = vmul.f32 %v1149, %v1195
        %v1197 = vsub.f32 1.0, %v1196
        %v1198 = vmul.f32 %v1195, %v1197
        %v1199 = vadd.f32 %v1195, %v1198
        %vm1200 = vweird.f32 %v1149
        %vm1201 = vweird.f32 %v1195
        %vm1202 = vmor %vm1200, %vm1201
        %v1203 = vsel %vm1202, %v1195, %v1199
        %v1204 = vand.u32 2147483647, %v1149
        %vm1205 = vcmp.eq.f32.partialorder %v1204, 8.507059e+37
        %v1206 = vand.u32 %v1149, 2147483648
        %v1207 = vor.u32 1.1754944e-38, %v1206
        %v1208 = vsel %vm1205, %v1207, %v1203
        %v1209 = vmul.f32 1.0, %v1208
        %v1210 = vmul.f32 %v1074, %v1164
        %v1211 = vmul.f32 %v1075, %v1179
        %v1212 = vmul.f32 %v1076, %v1194
        %v1213 = vmul.f32 %v1077, %v1209
        %v1214 = vadd.f32 %v1210, %v1211
        %v1215 = vadd.f32 %v1214, %v1212
        %v1216 = vadd.f32 %v1215, %v1213
        %v1217 = vmul.f32 %v1216, 0.25
        %v1218 = vld [vmem:[#allocation2] sm:$0xff]
        %v1219 = vld [vmem:[#allocation2 + $0x8] sm:$0xff]
        %v1220 = vld [vmem:[#allocation2 + $0x10] sm:$0xff]
        %v1221 = vld [vmem:[#allocation2 + $0x18] sm:$0xff]
        %v1222 = vld [vmem:[#allocation2 + $0x20] sm:$0xff]
        %v1223 = vld [vmem:[#allocation2 + $0x28] sm:$0xff]
        %v1224 = vld [vmem:[#allocation2 + $0x30] sm:$0xff]
        %v1225 = vld [vmem:[#allocation2 + $0x38] sm:$0xff]
        %v1226 = vld [vmem:[#allocation2 + $0x40] sm:$0xff]
        %v1227 = vld [vmem:[#allocation2 + $0x48] sm:$0xff]
        %v1228 = vld [vmem:[#allocation2 + $0x50] sm:$0xff]
        %v1229 = vld [vmem:[#allocation2 + $0x58] sm:$0xff]
        %v1230 = vld [vmem:[#allocation2 + $0x60] sm:$0xff]
        %v1231 = vld [vmem:[#allocation2 + $0x68] sm:$0xff]
        %v1232 = vld [vmem:[#allocation2 + $0x70] sm:$0xff]
        %v1233 = vld [vmem:[#allocation2 + $0x78] sm:$0xff]
        %v1234 = vld [vmem:[#allocation2 + $0x80] sm:$0xff]
        %v1235 = vld [vmem:[#allocation2 + $0x88] sm:$0xff]
        %v1236 = vld [vmem:[#allocation2 + $0x90] sm:$0xff]
        %v1237 = vld [vmem:[#allocation2 + $0x98] sm:$0xff]
        %v1238 = vld [vmem:[#allocation2 + $0xa0] sm:$0xff]
        %v1239 = vld [vmem:[#allocation2 + $0xa8] sm:$0xff]
        %v1240 = vld [vmem:[#allocation2 + $0xb0] sm:$0xff]
        %v1241 = vld [vmem:[#allocation2 + $0xb8] sm:$0xff]
        %v1242 = vld [vmem:[#allocation2 + $0xc0] sm:$0xff]
        %v1243 = vld [vmem:[#allocation2 + $0xc8] sm:$0xff]
        %v1244 = vld [vmem:[#allocation2 + $0xd0] sm:$0xff]
        %v1245 = vld [vmem:[#allocation2 + $0xd8] sm:$0xff]
        %v1246 = vld [vmem:[#allocation2 + $0xe0] sm:$0xff]
        %v1247 = vld [vmem:[#allocation2 + $0xe8] sm:$0xff]
        %v1248 = vld [vmem:[#allocation2 + $0xf0] sm:$0xff]
        %v1249 = vld [vmem:[#allocation2 + $0xf8] sm:$0xff]
        %v1250 = vld [vmem:[%s8] sm:$0xff]
        %v1252 = vperm.slane %v1250, 0
        %v1253 = vperm.slane %v1250, 1
        %v1254 = vperm.slane %v1250, 2
        %v1255 = vperm.slane %v1250, 3
        %v1256 = vperm.slane %v1250, 4
        %v1257 = vperm.slane %v1250, 5
        %v1258 = vperm.slane %v1250, 6
        %v1259 = vperm.slane %v1250, 7
        %v1269 = vsel %vm1050, %v1217, 0
        %1271 = vmatpush.msra.mxu0 0.0
        %1272 = vmatpush.msra.mxu0 0.0
        %1273 = vmatpush.msra.mxu0 0.0
        %1274 = vmatpush.msra.mxu0 0.0
        %1275 = vmatpush.msra.mxu0 0.0
        %1276 = vmatpush.msra.mxu0 0.0
        %1277 = vmatpush.msra.mxu0 0.0
        %1278 = vmatpush.msra.mxu0 0.0
        %1279 = vmatpush.msra.mxu0 0.0
        %1280 = vmatpush.msra.mxu0 0.0
        %1281 = vmatpush.msra.mxu0 0.0
        %1282 = vmatpush.msra.mxu0 0.0
        %1283 = vmatpush.msra.mxu0 %v1242
        %1284 = vmatpush.msra.mxu0 %v1234
        %1285 = vmatpush.msra.mxu0 %v1226
        %1286 = vmatpush.msra.mxu0 %v1218
        %1287 = vmatmul.f32.gmra.mxu0 %v1269
        %v1288 = vpop.f32.mrf.mxu0
        %v1289 = vadd.f32 %v1252, %v1288
        %1290 = vdwg.mxu0
        %1291 = vmatpush.msra.mxu0 0.0
        %1292 = vmatpush.msra.mxu0 0.0
        %1293 = vmatpush.msra.mxu0 0.0
        %1294 = vmatpush.msra.mxu0 0.0
        %1295 = vmatpush.msra.mxu0 0.0
        %1296 = vmatpush.msra.mxu0 0.0
        %1297 = vmatpush.msra.mxu0 0.0
        %1298 = vmatpush.msra.mxu0 0.0
        %1299 = vmatpush.msra.mxu0 0.0
        %1300 = vmatpush.msra.mxu0 0.0
        %1301 = vmatpush.msra.mxu0 0.0
        %1302 = vmatpush.msra.mxu0 0.0
        %1303 = vmatpush.msra.mxu0 %v1243
        %1304 = vmatpush.msra.mxu0 %v1235
        %1305 = vmatpush.msra.mxu0 %v1227
        %1306 = vmatpush.msra.mxu0 %v1219
        %1307 = vmatmul.f32.gmra.mxu0 %v1269
        %v1308 = vpop.f32.mrf.mxu0
        %v1309 = vadd.f32 %v1253, %v1308
        %1310 = vdwg.mxu0
        %1311 = vmatpush.msra.mxu0 0.0
        %1312 = vmatpush.msra.mxu0 0.0
        %1313 = vmatpush.msra.mxu0 0.0
        %1314 = vmatpush.msra.mxu0 0.0
        %1315 = vmatpush.msra.mxu0 0.0
        %1316 = vmatpush.msra.mxu0 0.0
        %1317 = vmatpush.msra.mxu0 0.0
        %1318 = vmatpush.msra.mxu0 0.0
        %1319 = vmatpush.msra.mxu0 0.0
        %1320 = vmatpush.msra.mxu0 0.0
        %1321 = vmatpush.msra.mxu0 0.0
        %1322 = vmatpush.msra.mxu0 0.0
        %1323 = vmatpush.msra.mxu0 %v1244
        %1324 = vmatpush.msra.mxu0 %v1236
        %1325 = vmatpush.msra.mxu0 %v1228
        %1326 = vmatpush.msra.mxu0 %v1220
        %1327 = vmatmul.f32.gmra.mxu0 %v1269
        %v1328 = vpop.f32.mrf.mxu0
        %v1329 = vadd.f32 %v1254, %v1328
        %1330 = vdwg.mxu0
        %1331 = vmatpush.msra.mxu0 0.0
        %1332 = vmatpush.msra.mxu0 0.0
        %1333 = vmatpush.msra.mxu0 0.0
        %1334 = vmatpush.msra.mxu0 0.0
        %1335 = vmatpush.msra.mxu0 0.0
        %1336 = vmatpush.msra.mxu0 0.0
        %1337 = vmatpush.msra.mxu0 0.0
        %1338 = vmatpush.msra.mxu0 0.0
        %1339 = vmatpush.msra.mxu0 0.0
        %1340 = vmatpush.msra.mxu0 0.0
        %1341 = vmatpush.msra.mxu0 0.0
        %1342 = vmatpush.msra.mxu0 0.0
        %1343 = vmatpush.msra.mxu0 %v1245
        %1344 = vmatpush.msra.mxu0 %v1237
        %1345 = vmatpush.msra.mxu0 %v1229
        %1346 = vmatpush.msra.mxu0 %v1221
        %1347 = vmatmul.f32.gmra.mxu0 %v1269
        %v1348 = vpop.f32.mrf.mxu0
        %v1349 = vadd.f32 %v1255, %v1348
        %1350 = vdwg.mxu0
        %1351 = vmatpush.msra.mxu0 0.0
        %1352 = vmatpush.msra.mxu0 0.0
        %1353 = vmatpush.msra.mxu0 0.0
        %1354 = vmatpush.msra.mxu0 0.0
        %1355 = vmatpush.msra.mxu0 0.0
        %1356 = vmatpush.msra.mxu0 0.0
        %1357 = vmatpush.msra.mxu0 0.0
        %1358 = vmatpush.msra.mxu0 0.0
        %1359 = vmatpush.msra.mxu0 0.0
        %1360 = vmatpush.msra.mxu0 0.0
        %1361 = vmatpush.msra.mxu0 0.0
        %1362 = vmatpush.msra.mxu0 0.0
        %1363 = vmatpush.msra.mxu0 %v1246
        %1364 = vmatpush.msra.mxu0 %v1238
        %1365 = vmatpush.msra.mxu0 %v1230
        %1366 = vmatpush.msra.mxu0 %v1222
        %1367 = vmatmul.f32.gmra.mxu0 %v1269
        %v1368 = vpop.f32.mrf.mxu0
        %v1369 = vadd.f32 %v1256, %v1368
        %1370 = vdwg.mxu0
        %1371 = vmatpush.msra.mxu0 0.0
        %1372 = vmatpush.msra.mxu0 0.0
        %1373 = vmatpush.msra.mxu0 0.0
        %1374 = vmatpush.msra.mxu0 0.0
        %1375 = vmatpush.msra.mxu0 0.0
        %1376 = vmatpush.msra.mxu0 0.0
        %1377 = vmatpush.msra.mxu0 0.0
        %1378 = vmatpush.msra.mxu0 0.0
        %1379 = vmatpush.msra.mxu0 0.0
        %1380 = vmatpush.msra.mxu0 0.0
        %1381 = vmatpush.msra.mxu0 0.0
        %1382 = vmatpush.msra.mxu0 0.0
        %1383 = vmatpush.msra.mxu0 %v1247
        %1384 = vmatpush.msra.mxu0 %v1239
        %1385 = vmatpush.msra.mxu0 %v1231
        %1386 = vmatpush.msra.mxu0 %v1223
        %1387 = vmatmul.f32.gmra.mxu0 %v1269
        %v1388 = vpop.f32.mrf.mxu0
        %v1389 = vadd.f32 %v1257, %v1388
        %1390 = vdwg.mxu0
        %1391 = vmatpush.msra.mxu0 0.0
        %1392 = vmatpush.msra.mxu0 0.0
        %1393 = vmatpush.msra.mxu0 0.0
        %1394 = vmatpush.msra.mxu0 0.0
        %1395 = vmatpush.msra.mxu0 0.0
        %1396 = vmatpush.msra.mxu0 0.0
        %1397 = vmatpush.msra.mxu0 0.0
        %1398 = vmatpush.msra.mxu0 0.0
        %1399 = vmatpush.msra.mxu0 0.0
        %1400 = vmatpush.msra.mxu0 0.0
        %1401 = vmatpush.msra.mxu0 0.0
        %1402 = vmatpush.msra.mxu0 0.0
        %1403 = vmatpush.msra.mxu0 %v1248
        %1404 = vmatpush.msra.mxu0 %v1240
        %1405 = vmatpush.msra.mxu0 %v1232
        %1406 = vmatpush.msra.mxu0 %v1224
        %1407 = vmatmul.f32.gmra.mxu0 %v1269
        %v1408 = vpop.f32.mrf.mxu0
        %v1409 = vadd.f32 %v1258, %v1408
        %1410 = vdwg.mxu0
        %1411 = vmatpush.msra.mxu0 0.0
        %1412 = vmatpush.msra.mxu0 0.0
        %1413 = vmatpush.msra.mxu0 0.0
        %1414 = vmatpush.msra.mxu0 0.0
        %1415 = vmatpush.msra.mxu0 0.0
        %1416 = vmatpush.msra.mxu0 0.0
        %1417 = vmatpush.msra.mxu0 0.0
        %1418 = vmatpush.msra.mxu0 0.0
        %1419 = vmatpush.msra.mxu0 0.0
        %1420 = vmatpush.msra.mxu0 0.0
        %1421 = vmatpush.msra.mxu0 0.0
        %1422 = vmatpush.msra.mxu0 0.0
        %1423 = vmatpush.msra.mxu0 %v1249
        %1424 = vmatpush.msra.mxu0 %v1241
        %1425 = vmatpush.msra.mxu0 %v1233
        %1426 = vmatpush.msra.mxu0 %v1225
        %1427 = vmatmul.f32.gmra.mxu0 %v1269
        %v1428 = vpop.f32.mrf.mxu0
        %v1429 = vadd.f32 %v1259, %v1428
        %1430 = vdwg.mxu0
        %v1431 = vmax.f32 %v1289, %v1369
        %v1432 = vmax.f32 %v1309, %v1389
        %v1433 = vmax.f32 %v1329, %v1409
        %v1434 = vmax.f32 %v1349, %v1429
        %v1435 = vmax.f32 %v1431, %v1432
        %v1436 = vmax.f32 %v1433, %v1434
        %v1437 = vmax.f32 %v1435, %v1436
        %1438 = vmax.xlane.f32.xlu0 %v1437
        %v1439 = vpop.xlane.xlu0 %1438
        %v1440 = vsub.f32 %v1289, %v1439
        %v1441 = vsub.f32 %v1309, %v1439
        %v1442 = vsub.f32 %v1329, %v1439
        %v1443 = vsub.f32 %v1349, %v1439
        %v1444 = vsub.f32 %v1369, %v1439
        %v1445 = vsub.f32 %v1389, %v1439
        %v1446 = vsub.f32 %v1409, %v1439
        %v1447 = vsub.f32 %v1429, %v1439
        %v1448 = vmul.f32 %v1440, 1.442695
        %v1449 = vpow.pop %v1448
        %v1450 = vmul.f32 %v1441, 1.442695
        %v1451 = vpow.pop %v1450
        %v1452 = vmul.f32 %v1442, 1.442695
        %v1453 = vpow.pop %v1452
        %v1454 = vmul.f32 %v1443, 1.442695
        %v1455 = vpow.pop %v1454
        %v1456 = vmul.f32 %v1444, 1.442695
        %v1457 = vpow.pop %v1456
        %v1458 = vmul.f32 %v1445, 1.442695
        %v1459 = vpow.pop %v1458
        %v1460 = vmul.f32 %v1446, 1.442695
        %v1461 = vpow.pop %v1460
        %v1462 = vmul.f32 %v1447, 1.442695
        %v1463 = vpow.pop %v1462
        %v1464 = vadd.f32 %v1449, %v1451
        %v1465 = vadd.f32 %v1464, %v1453
        %v1466 = vadd.f32 %v1465, %v1455
        %v1467 = vadd.f32 %v1466, %v1457
        %v1468 = vadd.f32 %v1467, %v1459
        %v1469 = vadd.f32 %v1468, %v1461
        %v1470 = vadd.f32 %v1469, %v1463
        %1471 = vadd.xlane.f32.xlu0 %v1470
        %v1472 = vpop.xlane.xlu0 %1471
        %v1473 = vrcp.pop %v1472
        %v1474 = vmul.f32 %v1472, %v1473
        %v1475 = vsub.f32 1.0, %v1474
        %v1476 = vmul.f32 %v1473, %v1475
        %v1477 = vadd.f32 %v1473, %v1476
        %vm1478 = vweird.f32 %v1472
        %vm1479 = vweird.f32 %v1473
        %vm1480 = vmor %vm1478, %vm1479
        %v1481 = vsel %vm1480, %v1473, %v1477
        %v1482 = vand.u32 2147483647, %v1472
        %vm1483 = vcmp.eq.f32.partialorder %v1482, 8.507059e+37
        %v1484 = vand.u32 %v1472, 2147483648
        %v1485 = vor.u32 1.1754944e-38, %v1484
        %v1486 = vsel %vm1483, %v1485, %v1481
        %v1487 = vmul.f32 1.0, %v1486
        %v1488 = vmul.f32 %v1449, %v1487
        %v1489 = vmul.f32 %v1451, %v1487
        %v1490 = vmul.f32 %v1453, %v1487
        %v1491 = vmul.f32 %v1455, %v1487
        %v1492 = vmul.f32 %v1457, %v1487
        %v1493 = vmul.f32 %v1459, %v1487
        %v1494 = vmul.f32 %v1461, %v1487
        %v1495 = vmul.f32 %v1463, %v1487
        %1496 = vst [vmem:[%s343] sm:$0xff] %v1488
        %1497 = vst [vmem:[%s343 + $0x8] sm:$0xff] %v1489
        %1498 = vst [vmem:[%s343 + $0x10] sm:$0xff] %v1490
        %1499 = vst [vmem:[%s343 + $0x18] sm:$0xff] %v1491
        %1500 = vst [vmem:[%s343 + $0x20] sm:$0xff] %v1492
        %1501 = vst [vmem:[%s343 + $0x28] sm:$0xff] %v1493
        %1502 = vst [vmem:[%s343 + $0x30] sm:$0xff] %v1494
        %1503 = vst [vmem:[%s343 + $0x38] sm:$0xff] %v1495
        %s1504 = sand.u32 %s226, 1
        %s1505 = scalar_lea.sflag [#allocation4], %s1504
        %s1506 = sand.u32 %s226, 1
        %s1507 = smul.addr %s1506, 64
        %s1508 = scalar_lea.vmem [#allocation5], %s1507
        // Predicated region
        $region61: #{tpu_custom_call.1} parent=55 // pred_check
          %p1509 = pneg %p236
        $region62: #{tpu_custom_call.1} parent=55 // pred_check_branch
          %1511 = sbr.rel (%p1509) target = $region64
        $region63: #{tpu_custom_call.1} parent=55 // pred_region
          %1513 = vsyncadd %s1505, 0
          %s1514 = smul.addr %s24, 8
          %s1515 = smul.addr %s1514, 8
          %s1516 = scalar_lea.hbm %s9, %s1515
          %s1518 = sshll.u32 %s1508, 4
          %s1519 = int_to_ptr.vmem [resolvable:$true] %s1518
          %s1520 = sshll.u32 %s1516, 4
          %s1521 = int_to_ptr.hbm [resolvable:$true] %s1520
          %1523 = dma.vmem_to_hbm [thread:$0]  %s1519, 1024, %s1521, %s1505
        $region64: #{tpu_custom_call.1} parent=55 // pred_fallthru
          _
      $region56: #{tpu_custom_call.1} parent=5 // pred_fallthru
        _
      %p1524 = scmp.le.s32.totalorder 2, %s19
      // Predicated region
      $region65: #{tpu_custom_call.1} parent=5 // pred_check
        %p1525 = pneg %p1524
      $region66: #{tpu_custom_call.1} parent=5 // pred_check_branch
        %1527 = sbr.rel (%p1525) target = $region68
      $region67: #{tpu_custom_call.1} parent=5 // pred_region
        %s1528 = ssub.s32 %s19, 2
        // Predicated region
        $region69: #{tpu_custom_call.1} parent=67 // pred_check
          %p1529 = pneg %p242
        $region70: #{tpu_custom_call.1} parent=67 // pred_check_branch
          %1531 = sbr.rel (%p1529) target = $region72
        $region71: #{tpu_custom_call.1} parent=67 // pred_region
          %s1532 = sand.u32 %s227, 1
          %s1533 = scalar_lea.sflag [#allocation4], %s1532
          %s1534 = sand.u32 %s227, 1
          %s1535 = smul.addr %s1534, 64
          %s1536 = scalar_lea.vmem [#allocation5], %s1535
          %1538 = dma.done %s1533, 1024
        $region72: #{tpu_custom_call.1} parent=67 // pred_fallthru
          _
      $region68: #{tpu_custom_call.1} parent=5 // pred_fallthru
        _
    $region6: #{tpu_custom_call.1} parent=1 // loop_footer
      %s23 = sadd.s32 1, %s19
    $region7: #{tpu_custom_call.1} parent=1 // loop_footer_branch
      %18 = sbr.rel target = $region3
    $region8: #{tpu_custom_call.1} parent=1 // loop_exit
      _
    %1539 = vsyncpa [#allocation3], 1
    %s1540 = scalar_lea.sflag [#allocation3], 1
    %1541 = vsyncpa %s1540, 1
    %1542 = vsyncpa [#allocation4], 1
    %s1543 = scalar_lea.sflag [#allocation4], 1
    %1544 = vsyncpa %s1543, 1

</llo_original>
